<compile_context>
chip_gen: v7x
topology: tpu7x:2x2x1
jax: 0.10.0
libtpu: 0.0.40
codegen_flags: <defaults>
</compile_context>

<pallas_src>
import math
import functools

import jax
import jax.numpy as jnp
import numpy as np
from jax import lax
from jax.experimental import pallas as pl
from jax.experimental.pallas import tpu as pltpu


def _layernorm(x, gamma, beta, eps=1e-5):
    mu = jnp.mean(x, axis=-1, keepdims=True)
    var = jnp.mean((x - mu) ** 2, axis=-1, keepdims=True)
    return (x - mu) * lax.rsqrt(var + eps) * gamma + beta


def encoder_block_kernel(value_ref, key_ref, query_ref, bias_ref,
                         wv_ref, wk_ref, wq_ref,      # (E,E) block-diag, pre-T, bf16
                         wo_ref, bo_ref,              # (E,E) pre-T bf16, (1,E) f32
                         g1_ref, b1_ref,
                         w1_ref, bf1_ref,             # (E,FE) pre-T bf16, (1,FE) f32
                         w2_ref, bf2_ref,             # (FE,E) pre-T bf16, (1,E) f32
                         g2_ref, b2_ref,
                         out_ref,
                         kp_ref, vp_ref, ctx_ref,     # VMEM scratch
                         *, heads, head_dim, embed_size):
    f32 = jnp.float32
    bf16 = jnp.bfloat16

    # ---- K/V projection: computed once per batch element (first query tile)
    #      and cached in bf16 VMEM scratch; reused by every later query tile.
    @pl.when(pl.program_id(1) == 0)
    def _():
        k = key_ref[0]                           # (L, E) bf16
        v = value_ref[0]                         # (L, E) bf16
        kp_ref[...] = jnp.dot(k, wk_ref[...],
                              preferred_element_type=f32).astype(bf16)
        vp_ref[...] = jnp.dot(v, wv_ref[...],
                              preferred_element_type=f32).astype(bf16)

    q = query_ref[0]                             # (tq, E) f32 (also the residual)
    bias = bias_ref[0].astype(f32)               # (tq, L) additive mask bias

    # ---- Q projection, 1/sqrt(E) folded in before the QK matmul -----------
    scale = jnp.float32(1.0 / (embed_size ** 0.5))
    q_p = jnp.dot(q.astype(bf16), wq_ref[...], preferred_element_type=f32)
    q_s = (q_p * scale).astype(bf16)             # (tq, E)

    # ---- attention core: unrolled per-head loop on static slices ----------
    # (an h-batched einsum lowers to H separate MXU matmuls anyway; the loop
    #  avoids materializing (H,L,Dh) stacks and the final concat copy)
    for h in range(heads):
        sl = slice(h * head_dim, (h + 1) * head_dim)
        qh = q_s[:, sl]                          # (tq, Dh) bf16
        kh = kp_ref[:, sl]                       # (L,  Dh) bf16  (cached)
        vh = vp_ref[:, sl]                       # (L,  Dh) bf16  (cached)

        energy = lax.dot_general(qh, kh, (((1,), (1,)), ((), ())),
                                 preferred_element_type=f32)      # (tq, L)
        energy = energy + bias                    # additive mask (0 / -1e20)

        emax = jnp.max(energy, axis=-1, keepdims=True)
        p = jnp.exp(energy - emax)
        denom = jnp.sum(p, axis=-1, keepdims=True)
        attn = p * pl.reciprocal(denom, approx=True)              # EUP divide

        ctx_h = jnp.dot(attn.astype(bf16), vh, preferred_element_type=f32)
        ctx_ref[:, sl] = ctx_h.astype(bf16)       # write head directly into (tq,E)

    # ---- fc_out, residual + norm1 (dropout == identity in eval mode) ------
    attn_out = (jnp.dot(ctx_ref[...], wo_ref[...],
                        preferred_element_type=f32) + bo_ref[...])           # (tq, E)
    x = _layernorm(attn_out + q, g1_ref[...], b1_ref[...])

    # ---- feed-forward: Linear -> ReLU -> Linear (bf16 MXU, f32 accumulate)
    h1 = jnp.dot(x.astype(bf16), w1_ref[...], preferred_element_type=f32) + bf1_ref[...]
    h1 = jnp.maximum(h1, 0.0)
    ff = jnp.dot(h1.astype(bf16), w2_ref[...], preferred_element_type=f32) + bf2_ref[...]

    # ---- residual + norm2 (dropout == identity in eval mode) --------------
    out_ref[0] = _layernorm(ff + x, g2_ref[...], b2_ref[...])


def prepare_params(params, heads):
    """One-time wrapper-side layout work:
    - fold the shared per-head (Dh,Dh) projections into block-diagonal (E,E)
      weights (already transposed so the kernel never does `.T`),
    - pre-transpose fc_out / FFN weights,
    - cast all MXU weight operands to bf16 (halves HBM/VMEM traffic)."""
    bf16 = jnp.bfloat16

    def bd_t(w):  # nn.Linear (Dh,Dh) -> block-diag of w.T, shape (E,E)
        return jax.scipy.linalg.block_diag(*([w.T] * heads)).astype(bf16)

    return {
        "wv_bd": bd_t(params["wv"]),
        "wk_bd": bd_t(params["wk"]),
        "wq_bd": bd_t(params["wq"]),
        "wo_t": params["wo"].T.astype(bf16),
        "bo": params["bo"],
        "gamma1": params["gamma1"], "beta1": params["beta1"],
        "w1_t": params["w1"].T.astype(bf16),
        "bf1": params["bf1"],
        "w2_t": params["w2"].T.astype(bf16),
        "bf2": params["bf2"],
        "gamma2": params["gamma2"], "beta2": params["beta2"],
    }


def encoder_block(value, key, query, mask, params, *, heads, q_tile=256):
    B, L, E = query.shape
    head_dim = E // heads
    kp = prepare_params(params, heads)
    FE = kp["w1_t"].shape[1]
    bf16 = jnp.bfloat16

    # Tile query rows (attention/FFN/layernorm are row-wise in the query dim).
    # q_tile=256 amortizes per-step overhead on v5e/v6e; keep 128-256 on v7x.
    tq = min(q_tile, L)
    n_q = pl.cdiv(L, tq)

    # Stream K/V in bf16 (MXU-operand-only use); Q stays f32 for the residual.
    value_b = value.astype(bf16)
    key_b = key.astype(bf16)
    # Additive mask bias computed once: 0 where visible, -1e20 where masked.
    mask_bias = jnp.where(mask == 0, jnp.float32(-1e20),
                          jnp.float32(0.0)).astype(bf16)

    kern = functools.partial(encoder_block_kernel,
                             heads=heads, head_dim=head_dim, embed_size=E)

    kv_spec = pl.BlockSpec((1, L, E), lambda b, i: (b, 0, 0))     # constant in i
    q_spec = pl.BlockSpec((1, tq, E), lambda b, i: (b, i, 0))
    bias_spec = pl.BlockSpec((1, tq, L), lambda b, i: (b, i, 0))

    def const2d(shape):
        return pl.BlockSpec(shape, lambda b, i: (0, 0))

    in_specs = [
        kv_spec, kv_spec, q_spec, bias_spec,
        const2d((E, E)),              # wv_bd
        const2d((E, E)),              # wk_bd
        const2d((E, E)),              # wq_bd
        const2d((E, E)),              # wo_t
        const2d((1, E)),              # bo
        const2d((1, E)),              # gamma1
        const2d((1, E)),              # beta1
        const2d((E, FE)),             # w1_t
        const2d((1, FE)),             # bf1
        const2d((FE, E)),             # w2_t
        const2d((1, E)),              # bf2
        const2d((1, E)),              # gamma2
        const2d((1, E)),              # beta2
    ]

    out = pl.pallas_call(
        kern,
        out_shape=jax.ShapeDtypeStruct((B, L, E), jnp.float32),
        grid_spec=pltpu.PrefetchScalarGridSpec(
            num_scalar_prefetch=0,
            grid=(B, n_q),
            in_specs=in_specs,
            out_specs=pl.BlockSpec((1, tq, E), lambda b, i: (b, i, 0)),
            scratch_shapes=[
                pltpu.VMEM((L, E), bf16),    # projected-K cache
                pltpu.VMEM((L, E), bf16),    # projected-V cache
                pltpu.VMEM((tq, E), bf16),   # merged attention context
            ]),
        compiler_params=pltpu.CompilerParams(
            dimension_semantics=("parallel", "arbitrary"),
            vmem_limit_bytes=64 * 1024 * 1024),
    )(value_b, key_b, query, mask_bias,
      kp["wv_bd"], kp["wk_bd"], kp["wq_bd"], kp["wo_t"], kp["bo"],
      kp["gamma1"], kp["beta1"],
      kp["w1_t"], kp["bf1"], kp["w2_t"], kp["bf2"],
      kp["gamma2"], kp["beta2"])
    return out


def init_params(rng, embed_size, heads, forward_expansion):
    """Deterministic init mirroring nn.Linear defaults (uniform +/- 1/sqrt(fan_in))."""
    head_dim = embed_size // heads
    FE = forward_expansion * embed_size
    keys = jax.random.split(rng, 12)

    def lin_w(k, out_f, in_f):
        bound = 1.0 / math.sqrt(in_f)
        return jax.random.uniform(k, (out_f, in_f), jnp.float32, -bound, bound)

    def lin_b(k, out_f, in_f):
        bound = 1.0 / math.sqrt(in_f)
        return jax.random.uniform(k, (1, out_f), jnp.float32, -bound, bound)

    return {
        "wv": lin_w(keys[0], head_dim, head_dim),
        "wk": lin_w(keys[1], head_dim, head_dim),
        "wq": lin_w(keys[2], head_dim, head_dim),
        "wo": lin_w(keys[3], embed_size, heads * head_dim),
        "bo": lin_b(keys[4], embed_size, heads * head_dim),
        "gamma1": jnp.ones((1, embed_size), jnp.float32),
        "beta1": jnp.zeros((1, embed_size), jnp.float32),
        "w1": lin_w(keys[5], FE, embed_size),
        "bf1": lin_b(keys[6], FE, embed_size),
        "w2": lin_w(keys[7], embed_size, FE),
        "bf2": lin_b(keys[8], embed_size, FE),
        "gamma2": jnp.ones((1, embed_size), jnp.float32),
        "beta2": jnp.zeros((1, embed_size), jnp.float32),
    }


def encoder_block_reference(value, key, query, mask, params, *, heads):
    """Pure-JAX f32 reference mirroring the PyTorch forward (for validation)."""
    B, L, E = query.shape
    Dh = E // heads

    def split(x):
        return x.reshape(B, L, heads, Dh)

    v = jnp.einsum("blhd,od->blho", split(value), params["wv"])
    k = jnp.einsum("blhd,od->blho", split(key), params["wk"])
    q = jnp.einsum("blhd,od->blho", split(query), params["wq"])
    qh = jnp.transpose(q, (0, 2, 1, 3))     # (B,H,L,Dh)
    kh = jnp.transpose(k, (0, 2, 1, 3))
    energy = jnp.einsum("bhqd,bhkd->bhqk", qh, kh)
    energy = jnp.where(mask[:, None, :, :] == 0, -1e20, energy)
    attn = jax.nn.softmax(energy / (E ** 0.5), axis=3)
    out = jnp.einsum("bhql,blhd->bqhd", attn, v).reshape(B, L, heads * Dh)
    out = out @ params["wo"].T + params["bo"]

    def ln(x, g, b, eps=1e-5):
        mu = jnp.mean(x, axis=-1, keepdims=True)
        var = jnp.mean((x - mu) ** 2, axis=-1, keepdims=True)
        return (x - mu) / jnp.sqrt(var + eps) * g + b

    x = ln(out + query, params["gamma1"], params["beta1"])
    ff = jnp.maximum(x @ params["w1"].T + params["bf1"], 0.0) @ params["w2"].T + params["bf2"]
    return ln(ff + x, params["gamma2"], params["beta2"])


if __name__ == "__main__":
    B, L, E, H, FWD = 2, 8, 32, 4, 4

    rng = jax.random.PRNGKey(0)
    k_p, k_v, k_k, k_q = jax.random.split(rng, 4)
    params = init_params(k_p, E, H, FWD)

    value = jax.random.normal(k_v, (B, L, E), jnp.float32)
    key = jax.random.normal(k_k, (B, L, E), jnp.float32)
    query = jax.random.normal(k_q, (B, L, E), jnp.float32)
    mask = jnp.ones((B, L, L), jnp.float32)   # all-visible (mask==0 positions blocked)

    out = encoder_block(value, key, query, mask, params, heads=H)
    out = jax.block_until_ready(out)

    ref = encoder_block_reference(value, key, query, mask, params, heads=H)
    # Kernel uses bf16 MXU operands / bf16-streamed K,V with f32 accumulation
    # -> slightly looser tolerance than the pure-f32 reference.
    np.testing.assert_allclose(np.asarray(out), np.asarray(ref), rtol=5e-2, atol=5e-2)

    print("KERNEL_OK")
</pallas_src>

<mosaic_0001>
module attributes {stable_mosaic.version = 11 : i64} {
  func.func @encoder_block_kernel(%arg0: i32, %arg1: i32, %arg2: memref<1x8x32xbf16, #tpu.memory_space<vmem>>, %arg3: memref<1x8x32xbf16, #tpu.memory_space<vmem>>, %arg4: memref<1x8x32xf32, #tpu.memory_space<vmem>>, %arg5: memref<1x8x8xbf16, #tpu.memory_space<vmem>>, %arg6: memref<32x32xbf16, #tpu.memory_space<vmem>>, %arg7: memref<32x32xbf16, #tpu.memory_space<vmem>>, %arg8: memref<32x32xbf16, #tpu.memory_space<vmem>>, %arg9: memref<32x32xbf16, #tpu.memory_space<vmem>>, %arg10: memref<1x32xf32, #tpu.memory_space<vmem>>, %arg11: memref<1x32xf32, #tpu.memory_space<vmem>>, %arg12: memref<1x32xf32, #tpu.memory_space<vmem>>, %arg13: memref<32x128xbf16, #tpu.memory_space<vmem>>, %arg14: memref<1x128xf32, #tpu.memory_space<vmem>>, %arg15: memref<128x32xbf16, #tpu.memory_space<vmem>>, %arg16: memref<1x32xf32, #tpu.memory_space<vmem>>, %arg17: memref<1x32xf32, #tpu.memory_space<vmem>>, %arg18: memref<1x32xf32, #tpu.memory_space<vmem>>, %arg19: memref<1x8x32xf32, #tpu.memory_space<vmem>>, %arg20: memref<8x32xbf16, #tpu.memory_space<vmem>>, %arg21: memref<8x32xbf16, #tpu.memory_space<vmem>>, %arg22: memref<8x32xbf16, #tpu.memory_space<vmem>>) attributes {dimension_semantics = [#tpu.dimension_semantics<parallel>, #tpu.dimension_semantics<arbitrary>], iteration_bounds = array<i64: 2, 1>, scalar_prefetch = 0 : i64, scratch_operands = 3 : i64, tpu.core_type = #tpu.core_type<tc>, window_params = [{transform_indices = @transform_0, window_bounds = array<i64: 1, 8, 32>}, {transform_indices = @transform_1, window_bounds = array<i64: 1, 8, 32>}, {transform_indices = @transform_2, window_bounds = array<i64: 1, 8, 32>}, {transform_indices = @transform_3, window_bounds = array<i64: 1, 8, 8>}, {pipeline_mode = #tpu.pipeline_mode<synchronous>, transform_indices = @transform_4, window_bounds = array<i64: 32, 32>}, {pipeline_mode = #tpu.pipeline_mode<synchronous>, transform_indices = @transform_5, window_bounds = array<i64: 32, 32>}, {pipeline_mode = #tpu.pipeline_mode<synchronous>, transform_indices = @transform_6, window_bounds = array<i64: 32, 32>}, {pipeline_mode = #tpu.pipeline_mode<synchronous>, transform_indices = @transform_7, window_bounds = array<i64: 32, 32>}, {pipeline_mode = #tpu.pipeline_mode<synchronous>, transform_indices = @transform_8, window_bounds = array<i64: 1, 32>}, {pipeline_mode = #tpu.pipeline_mode<synchronous>, transform_indices = @transform_9, window_bounds = array<i64: 1, 32>}, {pipeline_mode = #tpu.pipeline_mode<synchronous>, transform_indices = @transform_10, window_bounds = array<i64: 1, 32>}, {pipeline_mode = #tpu.pipeline_mode<synchronous>, transform_indices = @transform_11, window_bounds = array<i64: 32, 128>}, {pipeline_mode = #tpu.pipeline_mode<synchronous>, transform_indices = @transform_12, window_bounds = array<i64: 1, 128>}, {pipeline_mode = #tpu.pipeline_mode<synchronous>, transform_indices = @transform_13, window_bounds = array<i64: 128, 32>}, {pipeline_mode = #tpu.pipeline_mode<synchronous>, transform_indices = @transform_14, window_bounds = array<i64: 1, 32>}, {pipeline_mode = #tpu.pipeline_mode<synchronous>, transform_indices = @transform_15, window_bounds = array<i64: 1, 32>}, {pipeline_mode = #tpu.pipeline_mode<synchronous>, transform_indices = @transform_16, window_bounds = array<i64: 1, 32>}, {transform_indices = @transform_17, window_bounds = array<i64: 1, 8, 32>}]} {
    %c0_i32 = arith.constant 0 : i32
    %0 = arith.cmpi eq, %arg1, %c0_i32 : i32
    %1 = arith.extui %0 : i1 to i32
    %c0_i32_0 = arith.constant 0 : i32
    %2 = arith.cmpi ne, %1, %c0_i32_0 : i32
    scf.if %2 {
      %c0_85 = arith.constant 0 : index
      %c0_86 = arith.constant 0 : index
      %c0_87 = arith.constant 0 : index
      %163 = vector.load %arg3[%c0_85, %c0_86, %c0_87] : memref<1x8x32xbf16, #tpu.memory_space<vmem>>, vector<1x8x32xbf16>
      %164 = vector.shape_cast %163 : vector<1x8x32xbf16> to vector<8x32xbf16>
      %c0_88 = arith.constant 0 : index
      %c0_89 = arith.constant 0 : index
      %c0_90 = arith.constant 0 : index
      %165 = vector.load %arg2[%c0_88, %c0_89, %c0_90] : memref<1x8x32xbf16, #tpu.memory_space<vmem>>, vector<1x8x32xbf16>
      %166 = vector.shape_cast %165 : vector<1x8x32xbf16> to vector<8x32xbf16>
      %c0_91 = arith.constant 0 : index
      %c0_92 = arith.constant 0 : index
      %167 = vector.load %arg7[%c0_91, %c0_92] : memref<32x32xbf16, #tpu.memory_space<vmem>>, vector<32x32xbf16>
      %cst_93 = arith.constant dense<0.000000e+00> : vector<8x32xf32>
      %168 = tpu.matmul %164, %167, %cst_93 {dimension_numbers = #tpu.dot_dimension_numbers<[1], [0], [0], [1], [0, 0, 1, 1], [], []>} : vector<8x32xbf16>, vector<32x32xbf16>, vector<8x32xf32> -> vector<8x32xf32>
      %169 = arith.truncf %168 : vector<8x32xf32> to vector<8x32xbf16>
      %c0_94 = arith.constant 0 : index
      %c0_95 = arith.constant 0 : index
      %170 = vector.load %arg20[%c0_94, %c0_95] : memref<8x32xbf16, #tpu.memory_space<vmem>>, vector<8x32xbf16>
      tpu.vector_store %arg20[%c0_94, %c0_95], %169 {strides = array<i32>} : memref<8x32xbf16, #tpu.memory_space<vmem>>, vector<8x32xbf16>,
      %c0_96 = arith.constant 0 : index
      %c0_97 = arith.constant 0 : index
      %171 = vector.load %arg6[%c0_96, %c0_97] : memref<32x32xbf16, #tpu.memory_space<vmem>>, vector<32x32xbf16>
      %cst_98 = arith.constant dense<0.000000e+00> : vector<8x32xf32>
      %172 = tpu.matmul %166, %171, %cst_98 {dimension_numbers = #tpu.dot_dimension_numbers<[1], [0], [0], [1], [0, 0, 1, 1], [], []>} : vector<8x32xbf16>, vector<32x32xbf16>, vector<8x32xf32> -> vector<8x32xf32>
      %173 = arith.truncf %172 : vector<8x32xf32> to vector<8x32xbf16>
      %c0_99 = arith.constant 0 : index
      %c0_100 = arith.constant 0 : index
      %174 = vector.load %arg21[%c0_99, %c0_100] : memref<8x32xbf16, #tpu.memory_space<vmem>>, vector<8x32xbf16>
      tpu.vector_store %arg21[%c0_99, %c0_100], %173 {strides = array<i32>} : memref<8x32xbf16, #tpu.memory_space<vmem>>, vector<8x32xbf16>,
    } else {
    }
    %c0 = arith.constant 0 : index
    %c0_1 = arith.constant 0 : index
    %c0_2 = arith.constant 0 : index
    %3 = vector.load %arg4[%c0, %c0_1, %c0_2] : memref<1x8x32xf32, #tpu.memory_space<vmem>>, vector<1x8x32xf32>
    %4 = vector.shape_cast %3 : vector<1x8x32xf32> to vector<8x32xf32>
    %c0_3 = arith.constant 0 : index
    %c0_4 = arith.constant 0 : index
    %c0_5 = arith.constant 0 : index
    %5 = vector.load %arg5[%c0_3, %c0_4, %c0_5] : memref<1x8x8xbf16, #tpu.memory_space<vmem>>, vector<1x8x8xbf16>
    %6 = vector.shape_cast %5 : vector<1x8x8xbf16> to vector<8x8xbf16>
    %7 = arith.extf %6 : vector<8x8xbf16> to vector<8x8xf32>
    %8 = arith.truncf %4 : vector<8x32xf32> to vector<8x32xbf16>
    %c0_6 = arith.constant 0 : index
    %c0_7 = arith.constant 0 : index
    %9 = vector.load %arg8[%c0_6, %c0_7] : memref<32x32xbf16, #tpu.memory_space<vmem>>, vector<32x32xbf16>
    %cst = arith.constant dense<0.000000e+00> : vector<8x32xf32>
    %10 = tpu.matmul %8, %9, %cst {dimension_numbers = #tpu.dot_dimension_numbers<[1], [0], [0], [1], [0, 0, 1, 1], [], []>} : vector<8x32xbf16>, vector<32x32xbf16>, vector<8x32xf32> -> vector<8x32xf32>
    %cst_8 = arith.constant 0.176776692 : f32
    %11 = vector.broadcast %cst_8 : f32 to vector<8x32xf32>
    %12 = arith.mulf %10, %11 : vector<8x32xf32>
    %13 = arith.truncf %12 : vector<8x32xf32> to vector<8x32xbf16>
    %14 = vector.extract_strided_slice %13 {offsets = [0, 0], sizes = [8, 8], strides = [1, 1]} : vector<8x32xbf16> to vector<8x8xbf16>
    %c0_9 = arith.constant 0 : index
    %c0_10 = arith.constant 0 : index
    %15 = vector.load %arg20[%c0_9, %c0_10] : memref<8x32xbf16, #tpu.memory_space<vmem>>, vector<8x8xbf16>
    %c0_11 = arith.constant 0 : index
    %c0_12 = arith.constant 0 : index
    %16 = vector.load %arg21[%c0_11, %c0_12] : memref<8x32xbf16, #tpu.memory_space<vmem>>, vector<8x8xbf16>
    %cst_13 = arith.constant dense<0.000000e+00> : vector<8x8xf32>
    %17 = tpu.matmul %14, %15, %cst_13 {dimension_numbers = #tpu.dot_dimension_numbers<[1], [1], [0], [0], [0, 0, 1, 0], [], []>} : vector<8x8xbf16>, vector<8x8xbf16>, vector<8x8xf32> -> vector<8x8xf32>
    %18 = arith.addf %17, %7 : vector<8x8xf32>
    %cst_14 = arith.constant dense<0xFF800000> : vector<8xf32>
    %19 = vector.multi_reduction <maximumf>, %18, %cst_14 [1] : vector<8x8xf32> to vector<8xf32>
    %20 = vector.shape_cast %19 : vector<8xf32> to vector<8x1xf32>
    %21 = vector.broadcast %20 : vector<8x1xf32> to vector<8x8xf32>
    %22 = arith.subf %18, %21 : vector<8x8xf32>
    %23 = math.exp %22 : vector<8x8xf32>
    %cst_15 = arith.constant dense<0.000000e+00> : vector<8xf32>
    %24 = vector.multi_reduction <add>, %23, %cst_15 [1] : vector<8x8xf32> to vector<8xf32>
    %25 = vector.shape_cast %24 : vector<8xf32> to vector<8x1xf32>
    %26 = tpu.reciprocal %25 {approx = true} : vector<8x1xf32> -> vector<8x1xf32>
    %27 = vector.broadcast %26 : vector<8x1xf32> to vector<8x8xf32>
    %28 = arith.mulf %23, %27 : vector<8x8xf32>
    %29 = arith.truncf %28 : vector<8x8xf32> to vector<8x8xbf16>
    %cst_16 = arith.constant dense<0.000000e+00> : vector<8x8xf32>
    %30 = tpu.matmul %29, %16, %cst_16 {dimension_numbers = #tpu.dot_dimension_numbers<[1], [0], [0], [1], [0, 0, 1, 1], [], []>} : vector<8x8xbf16>, vector<8x8xbf16>, vector<8x8xf32> -> vector<8x8xf32>
    %31 = arith.truncf %30 : vector<8x8xf32> to vector<8x8xbf16>
    %c0_17 = arith.constant 0 : index
    %c0_18 = arith.constant 0 : index
    %32 = vector.load %arg22[%c0_17, %c0_18] : memref<8x32xbf16, #tpu.memory_space<vmem>>, vector<8x8xbf16>
    tpu.vector_store %arg22[%c0_17, %c0_18], %31 {strides = array<i32>} : memref<8x32xbf16, #tpu.memory_space<vmem>>, vector<8x8xbf16>,
    %33 = vector.extract_strided_slice %13 {offsets = [0, 8], sizes = [8, 8], strides = [1, 1]} : vector<8x32xbf16> to vector<8x8xbf16>
    %c0_19 = arith.constant 0 : index
    %c8 = arith.constant 8 : index
    %34 = vector.load %arg20[%c0_19, %c8] : memref<8x32xbf16, #tpu.memory_space<vmem>>, vector<8x8xbf16>
    %c0_20 = arith.constant 0 : index
    %c8_21 = arith.constant 8 : index
    %35 = vector.load %arg21[%c0_20, %c8_21] : memref<8x32xbf16, #tpu.memory_space<vmem>>, vector<8x8xbf16>
    %cst_22 = arith.constant dense<0.000000e+00> : vector<8x8xf32>
    %36 = tpu.matmul %33, %34, %cst_22 {dimension_numbers = #tpu.dot_dimension_numbers<[1], [1], [0], [0], [0, 0, 1, 0], [], []>} : vector<8x8xbf16>, vector<8x8xbf16>, vector<8x8xf32> -> vector<8x8xf32>
    %37 = arith.addf %36, %7 : vector<8x8xf32>
    %cst_23 = arith.constant dense<0xFF800000> : vector<8xf32>
    %38 = vector.multi_reduction <maximumf>, %37, %cst_23 [1] : vector<8x8xf32> to vector<8xf32>
    %39 = vector.shape_cast %38 : vector<8xf32> to vector<8x1xf32>
    %40 = vector.broadcast %39 : vector<8x1xf32> to vector<8x8xf32>
    %41 = arith.subf %37, %40 : vector<8x8xf32>
    %42 = math.exp %41 : vector<8x8xf32>
    %cst_24 = arith.constant dense<0.000000e+00> : vector<8xf32>
    %43 = vector.multi_reduction <add>, %42, %cst_24 [1] : vector<8x8xf32> to vector<8xf32>
    %44 = vector.shape_cast %43 : vector<8xf32> to vector<8x1xf32>
    %45 = tpu.reciprocal %44 {approx = true} : vector<8x1xf32> -> vector<8x1xf32>
    %46 = vector.broadcast %45 : vector<8x1xf32> to vector<8x8xf32>
    %47 = arith.mulf %42, %46 : vector<8x8xf32>
    %48 = arith.truncf %47 : vector<8x8xf32> to vector<8x8xbf16>
    %cst_25 = arith.constant dense<0.000000e+00> : vector<8x8xf32>
    %49 = tpu.matmul %48, %35, %cst_25 {dimension_numbers = #tpu.dot_dimension_numbers<[1], [0], [0], [1], [0, 0, 1, 1], [], []>} : vector<8x8xbf16>, vector<8x8xbf16>, vector<8x8xf32> -> vector<8x8xf32>
    %50 = arith.truncf %49 : vector<8x8xf32> to vector<8x8xbf16>
    %c0_26 = arith.constant 0 : index
    %c8_27 = arith.constant 8 : index
    %51 = vector.load %arg22[%c0_26, %c8_27] : memref<8x32xbf16, #tpu.memory_space<vmem>>, vector<8x8xbf16>
    tpu.vector_store %arg22[%c0_26, %c8_27], %50 {strides = array<i32>} : memref<8x32xbf16, #tpu.memory_space<vmem>>, vector<8x8xbf16>,
    %52 = vector.extract_strided_slice %13 {offsets = [0, 16], sizes = [8, 8], strides = [1, 1]} : vector<8x32xbf16> to vector<8x8xbf16>
    %c0_28 = arith.constant 0 : index
    %c16 = arith.constant 16 : index
    %53 = vector.load %arg20[%c0_28, %c16] : memref<8x32xbf16, #tpu.memory_space<vmem>>, vector<8x8xbf16>
    %c0_29 = arith.constant 0 : index
    %c16_30 = arith.constant 16 : index
    %54 = vector.load %arg21[%c0_29, %c16_30] : memref<8x32xbf16, #tpu.memory_space<vmem>>, vector<8x8xbf16>
    %cst_31 = arith.constant dense<0.000000e+00> : vector<8x8xf32>
    %55 = tpu.matmul %52, %53, %cst_31 {dimension_numbers = #tpu.dot_dimension_numbers<[1], [1], [0], [0], [0, 0, 1, 0], [], []>} : vector<8x8xbf16>, vector<8x8xbf16>, vector<8x8xf32> -> vector<8x8xf32>
    %56 = arith.addf %55, %7 : vector<8x8xf32>
    %cst_32 = arith.constant dense<0xFF800000> : vector<8xf32>
    %57 = vector.multi_reduction <maximumf>, %56, %cst_32 [1] : vector<8x8xf32> to vector<8xf32>
    %58 = vector.shape_cast %57 : vector<8xf32> to vector<8x1xf32>
    %59 = vector.broadcast %58 : vector<8x1xf32> to vector<8x8xf32>
    %60 = arith.subf %56, %59 : vector<8x8xf32>
    %61 = math.exp %60 : vector<8x8xf32>
    %cst_33 = arith.constant dense<0.000000e+00> : vector<8xf32>
    %62 = vector.multi_reduction <add>, %61, %cst_33 [1] : vector<8x8xf32> to vector<8xf32>
    %63 = vector.shape_cast %62 : vector<8xf32> to vector<8x1xf32>
    %64 = tpu.reciprocal %63 {approx = true} : vector<8x1xf32> -> vector<8x1xf32>
    %65 = vector.broadcast %64 : vector<8x1xf32> to vector<8x8xf32>
    %66 = arith.mulf %61, %65 : vector<8x8xf32>
    %67 = arith.truncf %66 : vector<8x8xf32> to vector<8x8xbf16>
    %cst_34 = arith.constant dense<0.000000e+00> : vector<8x8xf32>
    %68 = tpu.matmul %67, %54, %cst_34 {dimension_numbers = #tpu.dot_dimension_numbers<[1], [0], [0], [1], [0, 0, 1, 1], [], []>} : vector<8x8xbf16>, vector<8x8xbf16>, vector<8x8xf32> -> vector<8x8xf32>
    %69 = arith.truncf %68 : vector<8x8xf32> to vector<8x8xbf16>
    %c0_35 = arith.constant 0 : index
    %c16_36 = arith.constant 16 : index
    %70 = vector.load %arg22[%c0_35, %c16_36] : memref<8x32xbf16, #tpu.memory_space<vmem>>, vector<8x8xbf16>
    tpu.vector_store %arg22[%c0_35, %c16_36], %69 {strides = array<i32>} : memref<8x32xbf16, #tpu.memory_space<vmem>>, vector<8x8xbf16>,
    %71 = vector.extract_strided_slice %13 {offsets = [0, 24], sizes = [8, 8], strides = [1, 1]} : vector<8x32xbf16> to vector<8x8xbf16>
    %c0_37 = arith.constant 0 : index
    %c24 = arith.constant 24 : index
    %72 = vector.load %arg20[%c0_37, %c24] : memref<8x32xbf16, #tpu.memory_space<vmem>>, vector<8x8xbf16>
    %c0_38 = arith.constant 0 : index
    %c24_39 = arith.constant 24 : index
    %73 = vector.load %arg21[%c0_38, %c24_39] : memref<8x32xbf16, #tpu.memory_space<vmem>>, vector<8x8xbf16>
    %cst_40 = arith.constant dense<0.000000e+00> : vector<8x8xf32>
    %74 = tpu.matmul %71, %72, %cst_40 {dimension_numbers = #tpu.dot_dimension_numbers<[1], [1], [0], [0], [0, 0, 1, 0], [], []>} : vector<8x8xbf16>, vector<8x8xbf16>, vector<8x8xf32> -> vector<8x8xf32>
    %75 = arith.addf %74, %7 : vector<8x8xf32>
    %cst_41 = arith.constant dense<0xFF800000> : vector<8xf32>
    %76 = vector.multi_reduction <maximumf>, %75, %cst_41 [1] : vector<8x8xf32> to vector<8xf32>
    %77 = vector.shape_cast %76 : vector<8xf32> to vector<8x1xf32>
    %78 = vector.broadcast %77 : vector<8x1xf32> to vector<8x8xf32>
    %79 = arith.subf %75, %78 : vector<8x8xf32>
    %80 = math.exp %79 : vector<8x8xf32>
    %cst_42 = arith.constant dense<0.000000e+00> : vector<8xf32>
    %81 = vector.multi_reduction <add>, %80, %cst_42 [1] : vector<8x8xf32> to vector<8xf32>
    %82 = vector.shape_cast %81 : vector<8xf32> to vector<8x1xf32>
    %83 = tpu.reciprocal %82 {approx = true} : vector<8x1xf32> -> vector<8x1xf32>
    %84 = vector.broadcast %83 : vector<8x1xf32> to vector<8x8xf32>
    %85 = arith.mulf %80, %84 : vector<8x8xf32>
    %86 = arith.truncf %85 : vector<8x8xf32> to vector<8x8xbf16>
    %cst_43 = arith.constant dense<0.000000e+00> : vector<8x8xf32>
    %87 = tpu.matmul %86, %73, %cst_43 {dimension_numbers = #tpu.dot_dimension_numbers<[1], [0], [0], [1], [0, 0, 1, 1], [], []>} : vector<8x8xbf16>, vector<8x8xbf16>, vector<8x8xf32> -> vector<8x8xf32>
    %88 = arith.truncf %87 : vector<8x8xf32> to vector<8x8xbf16>
    %c0_44 = arith.constant 0 : index
    %c24_45 = arith.constant 24 : index
    %89 = vector.load %arg22[%c0_44, %c24_45] : memref<8x32xbf16, #tpu.memory_space<vmem>>, vector<8x8xbf16>
    tpu.vector_store %arg22[%c0_44, %c24_45], %88 {strides = array<i32>} : memref<8x32xbf16, #tpu.memory_space<vmem>>, vector<8x8xbf16>,
    %c0_46 = arith.constant 0 : index
    %c0_47 = arith.constant 0 : index
    %90 = vector.load %arg22[%c0_46, %c0_47] : memref<8x32xbf16, #tpu.memory_space<vmem>>, vector<8x32xbf16>
    %c0_48 = arith.constant 0 : index
    %c0_49 = arith.constant 0 : index
    %91 = vector.load %arg9[%c0_48, %c0_49] : memref<32x32xbf16, #tpu.memory_space<vmem>>, vector<32x32xbf16>
    %cst_50 = arith.constant dense<0.000000e+00> : vector<8x32xf32>
    %92 = tpu.matmul %90, %91, %cst_50 {dimension_numbers = #tpu.dot_dimension_numbers<[1], [0], [0], [1], [0, 0, 1, 1], [], []>} : vector<8x32xbf16>, vector<32x32xbf16>, vector<8x32xf32> -> vector<8x32xf32>
    %c0_51 = arith.constant 0 : index
    %c0_52 = arith.constant 0 : index
    %93 = vector.load %arg10[%c0_51, %c0_52] : memref<1x32xf32, #tpu.memory_space<vmem>>, vector<1x32xf32>
    %94 = vector.broadcast %93 : vector<1x32xf32> to vector<8x32xf32>
    %95 = arith.addf %92, %94 : vector<8x32xf32>
    %96 = arith.addf %95, %4 : vector<8x32xf32>
    %c0_53 = arith.constant 0 : index
    %c0_54 = arith.constant 0 : index
    %97 = vector.load %arg11[%c0_53, %c0_54] : memref<1x32xf32, #tpu.memory_space<vmem>>, vector<1x32xf32>
    %c0_55 = arith.constant 0 : index
    %c0_56 = arith.constant 0 : index
    %98 = vector.load %arg12[%c0_55, %c0_56] : memref<1x32xf32, #tpu.memory_space<vmem>>, vector<1x32xf32>
    %cst_57 = arith.constant dense<0.000000e+00> : vector<8xf32>
    %99 = vector.multi_reduction <add>, %96, %cst_57 [1] : vector<8x32xf32> to vector<8xf32>
    %100 = vector.shape_cast %99 : vector<8xf32> to vector<8x1xf32>
    %cst_58 = arith.constant 3.200000e+01 : f32
    %101 = vector.broadcast %cst_58 : f32 to vector<8x1xf32>
    %102 = arith.divf %100, %101 : vector<8x1xf32>
    %103 = vector.broadcast %102 : vector<8x1xf32> to vector<8x32xf32>
    %104 = arith.subf %96, %103 : vector<8x32xf32>
    %105 = arith.mulf %104, %104 : vector<8x32xf32>
    %cst_59 = arith.constant dense<0.000000e+00> : vector<8xf32>
    %106 = vector.multi_reduction <add>, %105, %cst_59 [1] : vector<8x32xf32> to vector<8xf32>
    %107 = vector.shape_cast %106 : vector<8xf32> to vector<8x1xf32>
    %cst_60 = arith.constant 3.200000e+01 : f32
    %108 = vector.broadcast %cst_60 : f32 to vector<8x1xf32>
    %109 = arith.divf %107, %108 : vector<8x1xf32>
    %110 = vector.broadcast %102 : vector<8x1xf32> to vector<8x32xf32>
    %111 = arith.subf %96, %110 : vector<8x32xf32>
    %cst_61 = arith.constant 9.99999974E-6 : f32
    %112 = vector.broadcast %cst_61 : f32 to vector<8x1xf32>
    %113 = arith.addf %109, %112 : vector<8x1xf32>
    %114 = math.rsqrt %113 : vector<8x1xf32>
    %115 = vector.broadcast %114 : vector<8x1xf32> to vector<8x32xf32>
    %116 = arith.mulf %111, %115 : vector<8x32xf32>
    %117 = vector.broadcast %97 : vector<1x32xf32> to vector<8x32xf32>
    %118 = arith.mulf %116, %117 : vector<8x32xf32>
    %119 = vector.broadcast %98 : vector<1x32xf32> to vector<8x32xf32>
    %120 = arith.addf %118, %119 : vector<8x32xf32>
    %121 = arith.truncf %120 : vector<8x32xf32> to vector<8x32xbf16>
    %c0_62 = arith.constant 0 : index
    %c0_63 = arith.constant 0 : index
    %122 = vector.load %arg13[%c0_62, %c0_63] : memref<32x128xbf16, #tpu.memory_space<vmem>>, vector<32x128xbf16>
    %cst_64 = arith.constant dense<0.000000e+00> : vector<8x128xf32>
    %123 = tpu.matmul %121, %122, %cst_64 {dimension_numbers = #tpu.dot_dimension_numbers<[1], [0], [0], [1], [0, 0, 1, 1], [], []>} : vector<8x32xbf16>, vector<32x128xbf16>, vector<8x128xf32> -> vector<8x128xf32>
    %c0_65 = arith.constant 0 : index
    %c0_66 = arith.constant 0 : index
    %124 = vector.load %arg14[%c0_65, %c0_66] : memref<1x128xf32, #tpu.memory_space<vmem>>, vector<1x128xf32>
    %125 = vector.broadcast %124 : vector<1x128xf32> to vector<8x128xf32>
    %126 = arith.addf %123, %125 : vector<8x128xf32>
    %cst_67 = arith.constant 0.000000e+00 : f32
    %127 = vector.broadcast %cst_67 : f32 to vector<8x128xf32>
    %128 = arith.maximumf %126, %127 : vector<8x128xf32>
    %129 = arith.truncf %128 : vector<8x128xf32> to vector<8x128xbf16>
    %c0_68 = arith.constant 0 : index
    %c0_69 = arith.constant 0 : index
    %130 = vector.load %arg15[%c0_68, %c0_69] : memref<128x32xbf16, #tpu.memory_space<vmem>>, vector<128x32xbf16>
    %cst_70 = arith.constant dense<0.000000e+00> : vector<8x32xf32>
    %131 = tpu.matmul %129, %130, %cst_70 {dimension_numbers = #tpu.dot_dimension_numbers<[1], [0], [0], [1], [0, 0, 1, 1], [], []>} : vector<8x128xbf16>, vector<128x32xbf16>, vector<8x32xf32> -> vector<8x32xf32>
    %c0_71 = arith.constant 0 : index
    %c0_72 = arith.constant 0 : index
    %132 = vector.load %arg16[%c0_71, %c0_72] : memref<1x32xf32, #tpu.memory_space<vmem>>, vector<1x32xf32>
    %133 = vector.broadcast %132 : vector<1x32xf32> to vector<8x32xf32>
    %134 = arith.addf %131, %133 : vector<8x32xf32>
    %135 = arith.addf %134, %120 : vector<8x32xf32>
    %c0_73 = arith.constant 0 : index
    %c0_74 = arith.constant 0 : index
    %136 = vector.load %arg17[%c0_73, %c0_74] : memref<1x32xf32, #tpu.memory_space<vmem>>, vector<1x32xf32>
    %c0_75 = arith.constant 0 : index
    %c0_76 = arith.constant 0 : index
    %137 = vector.load %arg18[%c0_75, %c0_76] : memref<1x32xf32, #tpu.memory_space<vmem>>, vector<1x32xf32>
    %cst_77 = arith.constant dense<0.000000e+00> : vector<8xf32>
    %138 = vector.multi_reduction <add>, %135, %cst_77 [1] : vector<8x32xf32> to vector<8xf32>
    %139 = vector.shape_cast %138 : vector<8xf32> to vector<8x1xf32>
    %cst_78 = arith.constant 3.200000e+01 : f32
    %140 = vector.broadcast %cst_78 : f32 to vector<8x1xf32>
    %141 = arith.divf %139, %140 : vector<8x1xf32>
    %142 = vector.broadcast %141 : vector<8x1xf32> to vector<8x32xf32>
    %143 = arith.subf %135, %142 : vector<8x32xf32>
    %144 = arith.mulf %143, %143 : vector<8x32xf32>
    %cst_79 = arith.constant dense<0.000000e+00> : vector<8xf32>
    %145 = vector.multi_reduction <add>, %144, %cst_79 [1] : vector<8x32xf32> to vector<8xf32>
    %146 = vector.shape_cast %145 : vector<8xf32> to vector<8x1xf32>
    %cst_80 = arith.constant 3.200000e+01 : f32
    %147 = vector.broadcast %cst_80 : f32 to vector<8x1xf32>
    %148 = arith.divf %146, %147 : vector<8x1xf32>
    %149 = vector.broadcast %141 : vector<8x1xf32> to vector<8x32xf32>
    %150 = arith.subf %135, %149 : vector<8x32xf32>
    %cst_81 = arith.constant 9.99999974E-6 : f32
    %151 = vector.broadcast %cst_81 : f32 to vector<8x1xf32>
    %152 = arith.addf %148, %151 : vector<8x1xf32>
    %153 = math.rsqrt %152 : vector<8x1xf32>
    %154 = vector.broadcast %153 : vector<8x1xf32> to vector<8x32xf32>
    %155 = arith.mulf %150, %154 : vector<8x32xf32>
    %156 = vector.broadcast %136 : vector<1x32xf32> to vector<8x32xf32>
    %157 = arith.mulf %155, %156 : vector<8x32xf32>
    %158 = vector.broadcast %137 : vector<1x32xf32> to vector<8x32xf32>
    %159 = arith.addf %157, %158 : vector<8x32xf32>
    %c0_82 = arith.constant 0 : index
    %c0_83 = arith.constant 0 : index
    %c0_84 = arith.constant 0 : index
    %160 = vector.load %arg19[%c0_82, %c0_83, %c0_84] : memref<1x8x32xf32, #tpu.memory_space<vmem>>, vector<1x8x32xf32>
    %161 = vector.shape_cast %160 : vector<1x8x32xf32> to vector<8x32xf32>
    %162 = vector.shape_cast %159 : vector<8x32xf32> to vector<1x8x32xf32>
    tpu.vector_store %arg19[%c0_82, %c0_83, %c0_84], %162 {strides = array<i32>} : memref<1x8x32xf32, #tpu.memory_space<vmem>>, vector<1x8x32xf32>,
    return
  }
  func.func @transform_0(%arg0: i32, %arg1: i32) -> (i32, i32, i32) {
    %c0_i32 = arith.constant 0 : i32
    %c0_i32_0 = arith.constant 0 : i32
    %c0_i32_1 = arith.constant 0 : i32
    return %arg0, %c0_i32, %c0_i32_0 : i32, i32, i32
  }
  func.func @transform_1(%arg0: i32, %arg1: i32) -> (i32, i32, i32) {
    %c0_i32 = arith.constant 0 : i32
    %c0_i32_0 = arith.constant 0 : i32
    %c0_i32_1 = arith.constant 0 : i32
    return %arg0, %c0_i32, %c0_i32_0 : i32, i32, i32
  }
  func.func @transform_2(%arg0: i32, %arg1: i32) -> (i32, i32, i32) {
    %c0_i32 = arith.constant 0 : i32
    %c0_i32_0 = arith.constant 0 : i32
    return %arg0, %arg1, %c0_i32 : i32, i32, i32
  }
  func.func @transform_3(%arg0: i32, %arg1: i32) -> (i32, i32, i32) {
    %c0_i32 = arith.constant 0 : i32
    %c0_i32_0 = arith.constant 0 : i32
    return %arg0, %arg1, %c0_i32 : i32, i32, i32
  }
  func.func @transform_4(%arg0: i32, %arg1: i32) -> (i32, i32) {
    %c0_i32 = arith.constant 0 : i32
    %c0_i32_0 = arith.constant 0 : i32
    %c0_i32_1 = arith.constant 0 : i32
    return %c0_i32, %c0_i32_0 : i32, i32
  }
  func.func @transform_5(%arg0: i32, %arg1: i32) -> (i32, i32) {
    %c0_i32 = arith.constant 0 : i32
    %c0_i32_0 = arith.constant 0 : i32
    %c0_i32_1 = arith.constant 0 : i32
    return %c0_i32, %c0_i32_0 : i32, i32
  }
  func.func @transform_6(%arg0: i32, %arg1: i32) -> (i32, i32) {
    %c0_i32 = arith.constant 0 : i32
    %c0_i32_0 = arith.constant 0 : i32
    %c0_i32_1 = arith.constant 0 : i32
    return %c0_i32, %c0_i32_0 : i32, i32
  }
  func.func @transform_7(%arg0: i32, %arg1: i32) -> (i32, i32) {
    %c0_i32 = arith.constant 0 : i32
    %c0_i32_0 = arith.constant 0 : i32
    %c0_i32_1 = arith.constant 0 : i32
    return %c0_i32, %c0_i32_0 : i32, i32
  }
  func.func @transform_8(%arg0: i32, %arg1: i32) -> (i32, i32) {
    %c0_i32 = arith.constant 0 : i32
    %c0_i32_0 = arith.constant 0 : i32
    %c0_i32_1 = arith.constant 0 : i32
    return %c0_i32, %c0_i32_0 : i32, i32
  }
  func.func @transform_9(%arg0: i32, %arg1: i32) -> (i32, i32) {
    %c0_i32 = arith.constant 0 : i32
    %c0_i32_0 = arith.constant 0 : i32
    %c0_i32_1 = arith.constant 0 : i32
    return %c0_i32, %c0_i32_0 : i32, i32
  }
  func.func @transform_10(%arg0: i32, %arg1: i32) -> (i32, i32) {
    %c0_i32 = arith.constant 0 : i32
    %c0_i32_0 = arith.constant 0 : i32
    %c0_i32_1 = arith.constant 0 : i32
    return %c0_i32, %c0_i32_0 : i32, i32
  }
  func.func @transform_11(%arg0: i32, %arg1: i32) -> (i32, i32) {
    %c0_i32 = arith.constant 0 : i32
    %c0_i32_0 = arith.constant 0 : i32
    %c0_i32_1 = arith.constant 0 : i32
    return %c0_i32, %c0_i32_0 : i32, i32
  }
  func.func @transform_12(%arg0: i32, %arg1: i32) -> (i32, i32) {
    %c0_i32 = arith.constant 0 : i32
    %c0_i32_0 = arith.constant 0 : i32
    %c0_i32_1 = arith.constant 0 : i32
    return %c0_i32, %c0_i32_0 : i32, i32
  }
  func.func @transform_13(%arg0: i32, %arg1: i32) -> (i32, i32) {
    %c0_i32 = arith.constant 0 : i32
    %c0_i32_0 = arith.constant 0 : i32
    %c0_i32_1 = arith.constant 0 : i32
    return %c0_i32, %c0_i32_0 : i32, i32
  }
  func.func @transform_14(%arg0: i32, %arg1: i32) -> (i32, i32) {
    %c0_i32 = arith.constant 0 : i32
    %c0_i32_0 = arith.constant 0 : i32
    %c0_i32_1 = arith.constant 0 : i32
    return %c0_i32, %c0_i32_0 : i32, i32
  }
  func.func @transform_15(%arg0: i32, %arg1: i32) -> (i32, i32) {
    %c0_i32 = arith.constant 0 : i32
    %c0_i32_0 = arith.constant 0 : i32
    %c0_i32_1 = arith.constant 0 : i32
    return %c0_i32, %c0_i32_0 : i32, i32
  }
  func.func @transform_16(%arg0: i32, %arg1: i32) -> (i32, i32) {
    %c0_i32 = arith.constant 0 : i32
    %c0_i32_0 = arith.constant 0 : i32
    %c0_i32_1 = arith.constant 0 : i32
    return %c0_i32, %c0_i32_0 : i32, i32
  }
  func.func @transform_17(%arg0: i32, %arg1: i32) -> (i32, i32, i32) {
    %c0_i32 = arith.constant 0 : i32
    %c0_i32_0 = arith.constant 0 : i32
    return %arg0, %arg1, %c0_i32 : i32, i32, i32
  }
}

</mosaic_0001>

<llo_original>
// kernel: tpu_custom_call.1
$region0: #{tpu_custom_call.1}
  #allocation0 [shape = 'u32[]', space=smem, size = 0x4, offset = 0x4, fixed_abs, tag = 'smem constant byte address 0x4 - core index']
  #allocation1 [shape = 'u32[144,128]{1,0:T(1,128)}', space=vmem, size = 0x12000, scoped, tag = 'internal scratch']
  #allocation2 [shape = 'bf16[8,32]{1,0:T(8,128)(2,1)}', space=vmem, size = 0x800, scoped, tag = 'scratch operand']
  #allocation3 [shape = 'bf16[8,32]{1,0:T(8,128)(2,1)}', space=vmem, size = 0x800, scoped, tag = 'scratch operand']
  #allocation4 [shape = 'bf16[8,32]{1,0:T(8,128)(2,1)}', space=vmem, size = 0x800, scoped, tag = 'scratch operand']
  %s0 = inlined_call_operand.hbm [shape: bf16[2,8,32], index: 0, kind: input, shape index: {}]
  %s1 = inlined_call_operand.hbm [shape: bf16[2,8,32], index: 1, kind: input, shape index: {}]
  %s2 = inlined_call_operand.hbm [shape: f32[2,8,32], index: 2, kind: input, shape index: {}]
  %s3 = inlined_call_operand.hbm [shape: bf16[2,8,8], index: 3, kind: input, shape index: {}]
  %s4 = inlined_call_operand.hbm [shape: bf16[32,32], index: 4, kind: input, shape index: {}]
  %s5 = inlined_call_operand.hbm [shape: bf16[32,32], index: 5, kind: input, shape index: {}]
  %s6 = inlined_call_operand.hbm [shape: bf16[32,32], index: 6, kind: input, shape index: {}]
  %s7 = inlined_call_operand.hbm [shape: bf16[32,32], index: 7, kind: input, shape index: {}]
  %s8 = inlined_call_operand.hbm [shape: f32[1,32], index: 8, kind: input, shape index: {}]
  %s9 = inlined_call_operand.hbm [shape: f32[1,32], index: 9, kind: input, shape index: {}]
  %s10 = inlined_call_operand.hbm [shape: f32[1,32], index: 10, kind: input, shape index: {}]
  %s11 = inlined_call_operand.hbm [shape: bf16[32,128], index: 11, kind: input, shape index: {}]
  %s12 = inlined_call_operand.hbm [shape: f32[1,128], index: 12, kind: input, shape index: {}]
  %s13 = inlined_call_operand.hbm [shape: bf16[128,32], index: 13, kind: input, shape index: {}]
  %s14 = inlined_call_operand.hbm [shape: f32[1,32], index: 14, kind: input, shape index: {}]
  %s15 = inlined_call_operand.hbm [shape: f32[1,32], index: 15, kind: input, shape index: {}]
  %s16 = inlined_call_operand.hbm [shape: f32[1,32], index: 16, kind: input, shape index: {}]
  %s17 = inlined_call_operand.hbm [shape: f32[2,8,32], index: 17, kind: output, shape index: {}]
  %s18 = sld [smem:[#allocation0]]
  $region173: #{tpu_custom_call.1} parent=0
    _
  %s20 = ssub.s32 1, %s18
  %s21 = scalar_select 0, %s20, %s18
  $region1: #{tpu_custom_call.1} parent=0
    #allocation5 [shape = 'u8[4096]{0}', space=vmem, size = 0x1000, scoped, tag = 'input window, operand 0']
    #allocation6 [shape = 's32[2]{0}', space=sflag, size = 0x8, scoped, tag = 'scoped memory for tpu_custom_call.1']
    #allocation7 [shape = 's32[2]{0}', space=sflag, size = 0x8, scoped, tag = 'scoped memory for tpu_custom_call.1']
    #allocation8 [shape = 'u8[4096]{0}', space=vmem, size = 0x1000, scoped, tag = 'input window, operand 1']
    #allocation9 [shape = 's32[2]{0}', space=sflag, size = 0x8, scoped, tag = 'scoped memory for tpu_custom_call.1']
    #allocation10 [shape = 'u8[8192]{0}', space=vmem, size = 0x2000, scoped, tag = 'input window, operand 2']
    #allocation11 [shape = 'u8[4096]{0}', space=vmem, size = 0x1000, scoped, tag = 'input window, operand 3']
    #allocation12 [shape = 's32[2]{0}', space=sflag, size = 0x8, scoped, tag = 'scoped memory for tpu_custom_call.1']
    #allocation13 [shape = 'u8[8192]{0}', space=vmem, size = 0x2000, scoped, tag = 'input window, operand 4, single buffered']
    #allocation14 [shape = 'u8[8192]{0}', space=vmem, size = 0x2000, scoped, tag = 'input window, operand 5, single buffered']
    #allocation15 [shape = 's32[1]{0}', space=sflag, size = 0x4, scoped, tag = 'scoped memory for tpu_custom_call.1']
    #allocation16 [shape = 'u8[8192]{0}', space=vmem, size = 0x2000, scoped, tag = 'input window, operand 6, single buffered']
    #allocation17 [shape = 'u8[8192]{0}', space=vmem, size = 0x2000, scoped, tag = 'input window, operand 7, single buffered']
    #allocation18 [shape = 's32[1]{0}', space=sflag, size = 0x4, scoped, tag = 'scoped memory for tpu_custom_call.1']
    #allocation19 [shape = 'u8[512]{0}', space=vmem, size = 0x400, scoped, tag = 'input window, operand 8, single buffered']
    #allocation20 [shape = 'u8[512]{0}', space=vmem, size = 0x400, scoped, tag = 'input window, operand 9, single buffered']
    #allocation21 [shape = 's32[1]{0}', space=sflag, size = 0x4, scoped, tag = 'scoped memory for tpu_custom_call.1']
    #allocation22 [shape = 'u8[512]{0}', space=vmem, size = 0x400, scoped, tag = 'input window, operand 10, single buffered']
    #allocation23 [shape = 'u8[8192]{0}', space=vmem, size = 0x2000, scoped, tag = 'input window, operand 11, single buffered']
    #allocation24 [shape = 's32[1]{0}', space=sflag, size = 0x4, scoped, tag = 'scoped memory for tpu_custom_call.1']
    #allocation25 [shape = 'u8[512]{0}', space=vmem, size = 0x400, scoped, tag = 'input window, operand 12, single buffered']
    #allocation26 [shape = 'u8[32768]{0}', space=vmem, size = 0x8000, scoped, tag = 'input window, operand 13, single buffered']
    #allocation27 [shape = 's32[1]{0}', space=sflag, size = 0x4, scoped, tag = 'scoped memory for tpu_custom_call.1']
    #allocation28 [shape = 'u8[512]{0}', space=vmem, size = 0x400, scoped, tag = 'input window, operand 14, single buffered']
    #allocation29 [shape = 'u8[512]{0}', space=vmem, size = 0x400, scoped, tag = 'input window, operand 15, single buffered']
    #allocation30 [shape = 's32[1]{0}', space=sflag, size = 0x4, scoped, tag = 'scoped memory for tpu_custom_call.1']
    #allocation31 [shape = 'u8[512]{0}', space=vmem, size = 0x400, scoped, tag = 'input window, operand 16, single buffered']
    #allocation32 [shape = 'u8[8192]{0}', space=vmem, size = 0x2000, scoped, tag = 'output window, operand 0']
    %22 = vsyncpa [#allocation6], 0
    %s23 = scalar_lea.sflag [#allocation6], 1
    %24 = vsyncpa %s23, 0
    %25 = vsyncpa [#allocation9], 0
    %s26 = scalar_lea.sflag [#allocation9], 1
    %27 = vsyncpa %s26, 0
    %28 = vsyncpa [#allocation12], 0
    %s29 = scalar_lea.sflag [#allocation12], 1
    %30 = vsyncpa %s29, 0
    %31 = vsyncpa [#allocation15], 0
    %32 = vsyncpa [#allocation18], 0
    %33 = vsyncpa [#allocation21], 0
    %34 = vsyncpa [#allocation24], 0
    %35 = vsyncpa [#allocation27], 0
    %36 = vsyncpa [#allocation30], 0
    %37 = vsyncpa [#allocation7], 0
    %s38 = scalar_lea.sflag [#allocation7], 1
    %39 = vsyncpa %s38, 0
    loop: start=0, step=1, limit=4
    $region2: #{tpu_custom_call.1} parent=1 // loop_pre_header
      _
    $region3: #{tpu_custom_call.1} parent=1 // loop_header
      %s41 = sphi 0, %s45
      %p42 = scmp.ge.s32.totalorder %s41, 4
      %s48 = sphi 0, %s60
      %s49 = sphi 0, %s56
      %s50 = sphi 0, %s48
      %s51 = sphi 0, %s49
      %s52 = sphi 0, %s50
      %s53 = sphi 0, %s51
      %s63 = sphi 0, %s65
      %s66 = sphi 0, %s63
      %s67 = sphi 0, %s66
      %s83 = sphi 0, %s67
      %s89 = sphi 0, %s91
      %s92 = sphi 0, %s89
      %s93 = sphi 0, %s92
      %s109 = sphi 0, %s93
      %s117 = sphi 0, %s119
      %s120 = sphi 0, %s117
      %s121 = sphi 0, %s120
      %s137 = sphi 0, %s121
      %s145 = sphi 0, %s147
      %s148 = sphi 0, %s145
      %s149 = sphi 0, %s148
      %s165 = sphi 0, %s149
      %s169 = sphi 0, %s169
      %s171 = sphi 0, %s169
      %s172 = sphi 0, %s171
      %s186 = sphi 0, %s172
      %s190 = sphi 0, %s190
      %s192 = sphi 0, %s190
      %s193 = sphi 0, %s192
      %s207 = sphi 0, %s193
      %s211 = sphi 0, %s211
      %s213 = sphi 0, %s211
      %s214 = sphi 0, %s213
      %s228 = sphi 0, %s214
      %s232 = sphi 0, %s232
      %s234 = sphi 0, %s232
      %s235 = sphi 0, %s234
      %s249 = sphi 0, %s235
      %s253 = sphi 0, %s253
      %s255 = sphi 0, %s253
      %s256 = sphi 0, %s255
      %s270 = sphi 0, %s256
      %s274 = sphi 0, %s274
      %s276 = sphi 0, %s274
      %s277 = sphi 0, %s276
      %s291 = sphi 0, %s277
      %s295 = sphi 0, %s295
      %s297 = sphi 0, %s295
      %s298 = sphi 0, %s297
      %s312 = sphi 0, %s298
      %s316 = sphi 0, %s316
      %s318 = sphi 0, %s316
      %s319 = sphi 0, %s318
      %s333 = sphi 0, %s319
      %s337 = sphi 0, %s337
      %s339 = sphi 0, %s337
      %s340 = sphi 0, %s339
      %s354 = sphi 0, %s340
      %s358 = sphi 0, %s358
      %s360 = sphi 0, %s358
      %s361 = sphi 0, %s360
      %s375 = sphi 0, %s361
      %s379 = sphi 0, %s379
      %s381 = sphi 0, %s379
      %s382 = sphi 0, %s381
      %s396 = sphi 0, %s382
      %s400 = sphi 0, %s400
      %s402 = sphi 0, %s400
      %s403 = sphi 0, %s402
      %s417 = sphi 0, %s403
      %s421 = sphi 0, %s421
      %s423 = sphi 0, %s421
      %s424 = sphi 0, %s423
      %s438 = sphi 0, %s424
      %s446 = sphi 0, %s448
      %s449 = sphi 0, %s446
      %s450 = sphi 0, %s449
      %s466 = sphi 0, %s450
    $region4: #{tpu_custom_call.1} parent=1 // loop_header_branch
      %44 = sbr.rel (%p42) target = $region8
    $region5: #{tpu_custom_call.1} parent=1 // loop_body
      %s46 = ssub.s32 %s41, 1
      %s47 = ssub.s32 %s41, 2
      %s54 = sadd.s32 1, %s49
      %p55 = scmp.ge.s32.totalorder %s54, 1
      %s56 = scalar_select %p55, 0, %s54
      %s57 = sadd.s32 1, %s48
      %s58 = scalar_select %p55, %s57, %s48
      %p59 = scmp.ge.s32.totalorder %s58, 2
      %s60 = scalar_select %p59, 0, %s58
      %s61 = ssub.s32 %s48, %s60
      %p62 = scmp.eq.s32.totalorder %s61, 0
      %s64 = sadd.s32 %s63, 1
      %s65 = scalar_select %p62, %s63, %s64
      %p68 = pneg %p62
      %p69 = scmp.eq.s32.totalorder %s41, 1
      %p70 = por %p68, %p69
      %p71 = scmp.ne.s32.totalorder %s63, %s66
      %p72 = scmp.eq.s32.totalorder %s41, 0
      %p73 = por %p71, %p72
      %p74 = scmp.ne.s32.totalorder %s63, %s66
      %p75 = scmp.eq.s32.totalorder %s46, 1
      %p76 = por %p74, %p75
      %p77 = scmp.ne.s32.totalorder %s66, %s67
      %p78 = scmp.eq.s32.totalorder %s46, 0
      %p79 = por %p77, %p78
      %p80 = scmp.ne.s32.totalorder %s66, %s67
      %p81 = scmp.eq.s32.totalorder %s47, 1
      %p82 = por %p80, %p81
      %p84 = scmp.ne.s32.totalorder %s67, %s83
      %p85 = scmp.eq.s32.totalorder %s47, 0
      %p86 = por %p84, %p85
      %s87 = ssub.s32 %s48, %s60
      %p88 = scmp.eq.s32.totalorder %s87, 0
      %s90 = sadd.s32 %s89, 1
      %s91 = scalar_select %p88, %s89, %s90
      %p94 = pneg %p88
      %p95 = scmp.eq.s32.totalorder %s41, 1
      %p96 = por %p94, %p95
      %p97 = scmp.ne.s32.totalorder %s89, %s92
      %p98 = scmp.eq.s32.totalorder %s41, 0
      %p99 = por %p97, %p98
      %p100 = scmp.ne.s32.totalorder %s89, %s92
      %p101 = scmp.eq.s32.totalorder %s46, 1
      %p102 = por %p100, %p101
      %p103 = scmp.ne.s32.totalorder %s92, %s93
      %p104 = scmp.eq.s32.totalorder %s46, 0
      %p105 = por %p103, %p104
      %p106 = scmp.ne.s32.totalorder %s92, %s93
      %p107 = scmp.eq.s32.totalorder %s47, 1
      %p108 = por %p106, %p107
      %p110 = scmp.ne.s32.totalorder %s93, %s109
      %p111 = scmp.eq.s32.totalorder %s47, 0
      %p112 = por %p110, %p111
      %s113 = ssub.s32 %s48, %s60
      %s114 = ssub.s32 %s49, %s56
      %s115 = sor.u32 %s113, %s114
      %p116 = scmp.eq.s32.totalorder %s115, 0
      %s118 = sadd.s32 %s117, 1
      %s119 = scalar_select %p116, %s117, %s118
      %p122 = pneg %p116
      %p123 = scmp.eq.s32.totalorder %s41, 1
      %p124 = por %p122, %p123
      %p125 = scmp.ne.s32.totalorder %s117, %s120
      %p126 = scmp.eq.s32.totalorder %s41, 0
      %p127 = por %p125, %p126
      %p128 = scmp.ne.s32.totalorder %s117, %s120
      %p129 = scmp.eq.s32.totalorder %s46, 1
      %p130 = por %p128, %p129
      %p131 = scmp.ne.s32.totalorder %s120, %s121
      %p132 = scmp.eq.s32.totalorder %s46, 0
      %p133 = por %p131, %p132
      %p134 = scmp.ne.s32.totalorder %s120, %s121
      %p135 = scmp.eq.s32.totalorder %s47, 1
      %p136 = por %p134, %p135
      %p138 = scmp.ne.s32.totalorder %s121, %s137
      %p139 = scmp.eq.s32.totalorder %s47, 0
      %p140 = por %p138, %p139
      %s141 = ssub.s32 %s48, %s60
      %s142 = ssub.s32 %s49, %s56
      %s143 = sor.u32 %s141, %s142
      %p144 = scmp.eq.s32.totalorder %s143, 0
      %s146 = sadd.s32 %s145, 1
      %s147 = scalar_select %p144, %s145, %s146
      %p150 = pneg %p144
      %p151 = scmp.eq.s32.totalorder %s41, 1
      %p152 = por %p150, %p151
      %p153 = scmp.ne.s32.totalorder %s145, %s148
      %p154 = scmp.eq.s32.totalorder %s41, 0
      %p155 = por %p153, %p154
      %p156 = scmp.ne.s32.totalorder %s145, %s148
      %p157 = scmp.eq.s32.totalorder %s46, 1
      %p158 = por %p156, %p157
      %p159 = scmp.ne.s32.totalorder %s148, %s149
      %p160 = scmp.eq.s32.totalorder %s46, 0
      %p161 = por %p159, %p160
      %p162 = scmp.ne.s32.totalorder %s148, %s149
      %p163 = scmp.eq.s32.totalorder %s47, 1
      %p164 = por %p162, %p163
      %p166 = scmp.ne.s32.totalorder %s149, %s165
      %p167 = scmp.eq.s32.totalorder %s47, 0
      %p168 = por %p166, %p167
      %s170 = sadd.s32 %s169, 1
      %p173 = scmp.eq.s32.totalorder %s41, 1
      %p174 = scmp.ne.s32.totalorder %s169, %s171
      %p175 = scmp.eq.s32.totalorder %s41, 0
      %p176 = por %p174, %p175
      %p177 = scmp.ne.s32.totalorder %s169, %s171
      %p178 = scmp.eq.s32.totalorder %s46, 1
      %p179 = por %p177, %p178
      %p180 = scmp.ne.s32.totalorder %s171, %s172
      %p181 = scmp.eq.s32.totalorder %s46, 0
      %p182 = por %p180, %p181
      %p183 = scmp.ne.s32.totalorder %s171, %s172
      %p184 = scmp.eq.s32.totalorder %s47, 1
      %p185 = por %p183, %p184
      %p187 = scmp.ne.s32.totalorder %s172, %s186
      %p188 = scmp.eq.s32.totalorder %s47, 0
      %p189 = por %p187, %p188
      %s191 = sadd.s32 %s190, 1
      %p194 = scmp.eq.s32.totalorder %s41, 1
      %p195 = scmp.ne.s32.totalorder %s190, %s192
      %p196 = scmp.eq.s32.totalorder %s41, 0
      %p197 = por %p195, %p196
      %p198 = scmp.ne.s32.totalorder %s190, %s192
      %p199 = scmp.eq.s32.totalorder %s46, 1
      %p200 = por %p198, %p199
      %p201 = scmp.ne.s32.totalorder %s192, %s193
      %p202 = scmp.eq.s32.totalorder %s46, 0
      %p203 = por %p201, %p202
      %p204 = scmp.ne.s32.totalorder %s192, %s193
      %p205 = scmp.eq.s32.totalorder %s47, 1
      %p206 = por %p204, %p205
      %p208 = scmp.ne.s32.totalorder %s193, %s207
      %p209 = scmp.eq.s32.totalorder %s47, 0
      %p210 = por %p208, %p209
      %s212 = sadd.s32 %s211, 1
      %p215 = scmp.eq.s32.totalorder %s41, 1
      %p216 = scmp.ne.s32.totalorder %s211, %s213
      %p217 = scmp.eq.s32.totalorder %s41, 0
      %p218 = por %p216, %p217
      %p219 = scmp.ne.s32.totalorder %s211, %s213
      %p220 = scmp.eq.s32.totalorder %s46, 1
      %p221 = por %p219, %p220
      %p222 = scmp.ne.s32.totalorder %s213, %s214
      %p223 = scmp.eq.s32.totalorder %s46, 0
      %p224 = por %p222, %p223
      %p225 = scmp.ne.s32.totalorder %s213, %s214
      %p226 = scmp.eq.s32.totalorder %s47, 1
      %p227 = por %p225, %p226
      %p229 = scmp.ne.s32.totalorder %s214, %s228
      %p230 = scmp.eq.s32.totalorder %s47, 0
      %p231 = por %p229, %p230
      %s233 = sadd.s32 %s232, 1
      %p236 = scmp.eq.s32.totalorder %s41, 1
      %p237 = scmp.ne.s32.totalorder %s232, %s234
      %p238 = scmp.eq.s32.totalorder %s41, 0
      %p239 = por %p237, %p238
      %p240 = scmp.ne.s32.totalorder %s232, %s234
      %p241 = scmp.eq.s32.totalorder %s46, 1
      %p242 = por %p240, %p241
      %p243 = scmp.ne.s32.totalorder %s234, %s235
      %p244 = scmp.eq.s32.totalorder %s46, 0
      %p245 = por %p243, %p244
      %p246 = scmp.ne.s32.totalorder %s234, %s235
      %p247 = scmp.eq.s32.totalorder %s47, 1
      %p248 = por %p246, %p247
      %p250 = scmp.ne.s32.totalorder %s235, %s249
      %p251 = scmp.eq.s32.totalorder %s47, 0
      %p252 = por %p250, %p251
      %s254 = sadd.s32 %s253, 1
      %p257 = scmp.eq.s32.totalorder %s41, 1
      %p258 = scmp.ne.s32.totalorder %s253, %s255
      %p259 = scmp.eq.s32.totalorder %s41, 0
      %p260 = por %p258, %p259
      %p261 = scmp.ne.s32.totalorder %s253, %s255
      %p262 = scmp.eq.s32.totalorder %s46, 1
      %p263 = por %p261, %p262
      %p264 = scmp.ne.s32.totalorder %s255, %s256
      %p265 = scmp.eq.s32.totalorder %s46, 0
      %p266 = por %p264, %p265
      %p267 = scmp.ne.s32.totalorder %s255, %s256
      %p268 = scmp.eq.s32.totalorder %s47, 1
      %p269 = por %p267, %p268
      %p271 = scmp.ne.s32.totalorder %s256, %s270
      %p272 = scmp.eq.s32.totalorder %s47, 0
      %p273 = por %p271, %p272
      %s275 = sadd.s32 %s274, 1
      %p278 = scmp.eq.s32.totalorder %s41, 1
      %p279 = scmp.ne.s32.totalorder %s274, %s276
      %p280 = scmp.eq.s32.totalorder %s41, 0
      %p281 = por %p279, %p280
      %p282 = scmp.ne.s32.totalorder %s274, %s276
      %p283 = scmp.eq.s32.totalorder %s46, 1
      %p284 = por %p282, %p283
      %p285 = scmp.ne.s32.totalorder %s276, %s277
      %p286 = scmp.eq.s32.totalorder %s46, 0
      %p287 = por %p285, %p286
      %p288 = scmp.ne.s32.totalorder %s276, %s277
      %p289 = scmp.eq.s32.totalorder %s47, 1
      %p290 = por %p288, %p289
      %p292 = scmp.ne.s32.totalorder %s277, %s291
      %p293 = scmp.eq.s32.totalorder %s47, 0
      %p294 = por %p292, %p293
      %s296 = sadd.s32 %s295, 1
      %p299 = scmp.eq.s32.totalorder %s41, 1
      %p300 = scmp.ne.s32.totalorder %s295, %s297
      %p301 = scmp.eq.s32.totalorder %s41, 0
      %p302 = por %p300, %p301
      %p303 = scmp.ne.s32.totalorder %s295, %s297
      %p304 = scmp.eq.s32.totalorder %s46, 1
      %p305 = por %p303, %p304
      %p306 = scmp.ne.s32.totalorder %s297, %s298
      %p307 = scmp.eq.s32.totalorder %s46, 0
      %p308 = por %p306, %p307
      %p309 = scmp.ne.s32.totalorder %s297, %s298
      %p310 = scmp.eq.s32.totalorder %s47, 1
      %p311 = por %p309, %p310
      %p313 = scmp.ne.s32.totalorder %s298, %s312
      %p314 = scmp.eq.s32.totalorder %s47, 0
      %p315 = por %p313, %p314
      %s317 = sadd.s32 %s316, 1
      %p320 = scmp.eq.s32.totalorder %s41, 1
      %p321 = scmp.ne.s32.totalorder %s316, %s318
      %p322 = scmp.eq.s32.totalorder %s41, 0
      %p323 = por %p321, %p322
      %p324 = scmp.ne.s32.totalorder %s316, %s318
      %p325 = scmp.eq.s32.totalorder %s46, 1
      %p326 = por %p324, %p325
      %p327 = scmp.ne.s32.totalorder %s318, %s319
      %p328 = scmp.eq.s32.totalorder %s46, 0
      %p329 = por %p327, %p328
      %p330 = scmp.ne.s32.totalorder %s318, %s319
      %p331 = scmp.eq.s32.totalorder %s47, 1
      %p332 = por %p330, %p331
      %p334 = scmp.ne.s32.totalorder %s319, %s333
      %p335 = scmp.eq.s32.totalorder %s47, 0
      %p336 = por %p334, %p335
      %s338 = sadd.s32 %s337, 1
      %p341 = scmp.eq.s32.totalorder %s41, 1
      %p342 = scmp.ne.s32.totalorder %s337, %s339
      %p343 = scmp.eq.s32.totalorder %s41, 0
      %p344 = por %p342, %p343
      %p345 = scmp.ne.s32.totalorder %s337, %s339
      %p346 = scmp.eq.s32.totalorder %s46, 1
      %p347 = por %p345, %p346
      %p348 = scmp.ne.s32.totalorder %s339, %s340
      %p349 = scmp.eq.s32.totalorder %s46, 0
      %p350 = por %p348, %p349
      %p351 = scmp.ne.s32.totalorder %s339, %s340
      %p352 = scmp.eq.s32.totalorder %s47, 1
      %p353 = por %p351, %p352
      %p355 = scmp.ne.s32.totalorder %s340, %s354
      %p356 = scmp.eq.s32.totalorder %s47, 0
      %p357 = por %p355, %p356
      %s359 = sadd.s32 %s358, 1
      %p362 = scmp.eq.s32.totalorder %s41, 1
      %p363 = scmp.ne.s32.totalorder %s358, %s360
      %p364 = scmp.eq.s32.totalorder %s41, 0
      %p365 = por %p363, %p364
      %p366 = scmp.ne.s32.totalorder %s358, %s360
      %p367 = scmp.eq.s32.totalorder %s46, 1
      %p368 = por %p366, %p367
      %p369 = scmp.ne.s32.totalorder %s360, %s361
      %p370 = scmp.eq.s32.totalorder %s46, 0
      %p371 = por %p369, %p370
      %p372 = scmp.ne.s32.totalorder %s360, %s361
      %p373 = scmp.eq.s32.totalorder %s47, 1
      %p374 = por %p372, %p373
      %p376 = scmp.ne.s32.totalorder %s361, %s375
      %p377 = scmp.eq.s32.totalorder %s47, 0
      %p378 = por %p376, %p377
      %s380 = sadd.s32 %s379, 1
      %p383 = scmp.eq.s32.totalorder %s41, 1
      %p384 = scmp.ne.s32.totalorder %s379, %s381
      %p385 = scmp.eq.s32.totalorder %s41, 0
      %p386 = por %p384, %p385
      %p387 = scmp.ne.s32.totalorder %s379, %s381
      %p388 = scmp.eq.s32.totalorder %s46, 1
      %p389 = por %p387, %p388
      %p390 = scmp.ne.s32.totalorder %s381, %s382
      %p391 = scmp.eq.s32.totalorder %s46, 0
      %p392 = por %p390, %p391
      %p393 = scmp.ne.s32.totalorder %s381, %s382
      %p394 = scmp.eq.s32.totalorder %s47, 1
      %p395 = por %p393, %p394
      %p397 = scmp.ne.s32.totalorder %s382, %s396
      %p398 = scmp.eq.s32.totalorder %s47, 0
      %p399 = por %p397, %p398
      %s401 = sadd.s32 %s400, 1
      %p404 = scmp.eq.s32.totalorder %s41, 1
      %p405 = scmp.ne.s32.totalorder %s400, %s402
      %p406 = scmp.eq.s32.totalorder %s41, 0
      %p407 = por %p405, %p406
      %p408 = scmp.ne.s32.totalorder %s400, %s402
      %p409 = scmp.eq.s32.totalorder %s46, 1
      %p410 = por %p408, %p409
      %p411 = scmp.ne.s32.totalorder %s402, %s403
      %p412 = scmp.eq.s32.totalorder %s46, 0
      %p413 = por %p411, %p412
      %p414 = scmp.ne.s32.totalorder %s402, %s403
      %p415 = scmp.eq.s32.totalorder %s47, 1
      %p416 = por %p414, %p415
      %p418 = scmp.ne.s32.totalorder %s403, %s417
      %p419 = scmp.eq.s32.totalorder %s47, 0
      %p420 = por %p418, %p419
      %s422 = sadd.s32 %s421, 1
      %p425 = scmp.eq.s32.totalorder %s41, 1
      %p426 = scmp.ne.s32.totalorder %s421, %s423
      %p427 = scmp.eq.s32.totalorder %s41, 0
      %p428 = por %p426, %p427
      %p429 = scmp.ne.s32.totalorder %s421, %s423
      %p430 = scmp.eq.s32.totalorder %s46, 1
      %p431 = por %p429, %p430
      %p432 = scmp.ne.s32.totalorder %s423, %s424
      %p433 = scmp.eq.s32.totalorder %s46, 0
      %p434 = por %p432, %p433
      %p435 = scmp.ne.s32.totalorder %s423, %s424
      %p436 = scmp.eq.s32.totalorder %s47, 1
      %p437 = por %p435, %p436
      %p439 = scmp.ne.s32.totalorder %s424, %s438
      %p440 = scmp.eq.s32.totalorder %s47, 0
      %p441 = por %p439, %p440
      %s442 = ssub.s32 %s48, %s60
      %s443 = ssub.s32 %s49, %s56
      %s444 = sor.u32 %s442, %s443
      %p445 = scmp.eq.s32.totalorder %s444, 0
      %s447 = sadd.s32 %s446, 1
      %s448 = scalar_select %p445, %s446, %s447
      %p451 = pneg %p445
      %p452 = scmp.eq.s32.totalorder %s41, 1
      %p453 = por %p451, %p452
      %p454 = scmp.ne.s32.totalorder %s446, %s449
      %p455 = scmp.eq.s32.totalorder %s41, 0
      %p456 = por %p454, %p455
      %p457 = scmp.ne.s32.totalorder %s446, %s449
      %p458 = scmp.eq.s32.totalorder %s46, 1
      %p459 = por %p457, %p458
      %p460 = scmp.ne.s32.totalorder %s449, %s450
      %p461 = scmp.eq.s32.totalorder %s46, 0
      %p462 = por %p460, %p461
      %p463 = scmp.ne.s32.totalorder %s449, %s450
      %p464 = scmp.eq.s32.totalorder %s47, 1
      %p465 = por %p463, %p464
      %p467 = scmp.ne.s32.totalorder %s450, %s466
      %p468 = scmp.eq.s32.totalorder %s47, 0
      %p469 = por %p467, %p468
      %p470 = scmp.le.s32.totalorder 1, %s41
      %p471 = scmp.lt.s32.totalorder %s41, 3
      %p472 = pnand %p470, %p471
      %p473 = pneg %p472
      // Predicated region
      $region9: #{tpu_custom_call.1} parent=5 // pred_check
        _
      $region10: #{tpu_custom_call.1} parent=5 // pred_check_branch
        %475 = sbr.rel (%p472) target = $region12
      $region11: #{tpu_custom_call.1} parent=5 // pred_region
        %s476 = ssub.s32 %s41, 1
        // Predicated region
        $region13: #{tpu_custom_call.1} parent=11 // pred_check
          %p477 = pneg %p182
        $region14: #{tpu_custom_call.1} parent=11 // pred_check_branch
          %479 = sbr.rel (%p477) target = $region16
        $region15: #{tpu_custom_call.1} parent=11 // pred_region
          %s481 = ssub.s32 256, 256
          %482 = vsyncadd [#allocation12], %s481
          %s483 = sshll.u32 [#allocation13], 4
          %s484 = int_to_ptr.vmem [resolvable:$true] %s483
          %489 = dma.hbm_to_vmem [thread:$0]  %s4, 256, %s484, [#allocation12], 64, 64, 4
        $region16: #{tpu_custom_call.1} parent=11 // pred_fallthru
          _
        // Predicated region
        $region17: #{tpu_custom_call.1} parent=11 // pred_check
          %p490 = pneg %p203
        $region18: #{tpu_custom_call.1} parent=11 // pred_check_branch
          %492 = sbr.rel (%p490) target = $region20
        $region19: #{tpu_custom_call.1} parent=11 // pred_region
          %s494 = ssub.s32 256, 256
          %495 = vsyncadd [#allocation15], %s494
          %s496 = sshll.u32 [#allocation14], 4
          %s497 = int_to_ptr.vmem [resolvable:$true] %s496
          %502 = dma.hbm_to_vmem [thread:$0]  %s5, 256, %s497, [#allocation15], 64, 64, 4
        $region20: #{tpu_custom_call.1} parent=11 // pred_fallthru
          _
        // Predicated region
        $region21: #{tpu_custom_call.1} parent=11 // pred_check
          %p503 = pneg %p224
        $region22: #{tpu_custom_call.1} parent=11 // pred_check_branch
          %505 = sbr.rel (%p503) target = $region24
        $region23: #{tpu_custom_call.1} parent=11 // pred_region
          %s507 = ssub.s32 256, 256
          %508 = vsyncadd [#allocation15], %s507
          %s509 = sshll.u32 [#allocation16], 4
          %s510 = int_to_ptr.vmem [resolvable:$true] %s509
          %515 = dma.hbm_to_vmem [thread:$0]  %s6, 256, %s510, [#allocation15], 64, 64, 4
        $region24: #{tpu_custom_call.1} parent=11 // pred_fallthru
          _
        // Predicated region
        $region25: #{tpu_custom_call.1} parent=11 // pred_check
          %p516 = pneg %p245
        $region26: #{tpu_custom_call.1} parent=11 // pred_check_branch
          %518 = sbr.rel (%p516) target = $region28
        $region27: #{tpu_custom_call.1} parent=11 // pred_region
          %s520 = ssub.s32 256, 256
          %521 = vsyncadd [#allocation18], %s520
          %s522 = sshll.u32 [#allocation17], 4
          %s523 = int_to_ptr.vmem [resolvable:$true] %s522
          %528 = dma.hbm_to_vmem [thread:$0]  %s7, 256, %s523, [#allocation18], 64, 64, 4
        $region28: #{tpu_custom_call.1} parent=11 // pred_fallthru
          _
        // Predicated region
        $region29: #{tpu_custom_call.1} parent=11 // pred_check
          %p529 = pneg %p266
        $region30: #{tpu_custom_call.1} parent=11 // pred_check_branch
          %531 = sbr.rel (%p529) target = $region32
        $region31: #{tpu_custom_call.1} parent=11 // pred_region
          %s533 = ssub.s32 16, 16
          %534 = vsyncadd [#allocation18], %s533
          %s536 = sshll.u32 [#allocation19], 4
          %s537 = int_to_ptr.vmem [resolvable:$true] %s536
          %539 = dma.hbm_to_vmem [thread:$0]  %s8, 16, %s537, [#allocation18]
        $region32: #{tpu_custom_call.1} parent=11 // pred_fallthru
          _
        // Predicated region
        $region33: #{tpu_custom_call.1} parent=11 // pred_check
          %p540 = pneg %p287
        $region34: #{tpu_custom_call.1} parent=11 // pred_check_branch
          %542 = sbr.rel (%p540) target = $region36
        $region35: #{tpu_custom_call.1} parent=11 // pred_region
          %s544 = ssub.s32 16, 16
          %545 = vsyncadd [#allocation21], %s544
          %s547 = sshll.u32 [#allocation20], 4
          %s548 = int_to_ptr.vmem [resolvable:$true] %s547
          %550 = dma.hbm_to_vmem [thread:$0]  %s9, 16, %s548, [#allocation21]
        $region36: #{tpu_custom_call.1} parent=11 // pred_fallthru
          _
        // Predicated region
        $region37: #{tpu_custom_call.1} parent=11 // pred_check
          %p551 = pneg %p308
        $region38: #{tpu_custom_call.1} parent=11 // pred_check_branch
          %553 = sbr.rel (%p551) target = $region40
        $region39: #{tpu_custom_call.1} parent=11 // pred_region
          %s555 = ssub.s32 16, 16
          %556 = vsyncadd [#allocation21], %s555
          %s558 = sshll.u32 [#allocation22], 4
          %s559 = int_to_ptr.vmem [resolvable:$true] %s558
          %561 = dma.hbm_to_vmem [thread:$0]  %s10, 16, %s559, [#allocation21]
        $region40: #{tpu_custom_call.1} parent=11 // pred_fallthru
          _
        // Predicated region
        $region41: #{tpu_custom_call.1} parent=11 // pred_check
          %p562 = pneg %p329
        $region42: #{tpu_custom_call.1} parent=11 // pred_check_branch
          %564 = sbr.rel (%p562) target = $region44
        $region43: #{tpu_custom_call.1} parent=11 // pred_region
          %s566 = ssub.s32 256, 256
          %567 = vsyncadd [#allocation24], %s566
          %s568 = sshll.u32 [#allocation23], 4
          %s569 = int_to_ptr.vmem [resolvable:$true] %s568
          %574 = dma.hbm_to_vmem [thread:$0]  %s11, 256, %s569, [#allocation24], 64, 64, 4
        $region44: #{tpu_custom_call.1} parent=11 // pred_fallthru
          _
        // Predicated region
        $region45: #{tpu_custom_call.1} parent=11 // pred_check
          %p575 = pneg %p350
        $region46: #{tpu_custom_call.1} parent=11 // pred_check_branch
          %577 = sbr.rel (%p575) target = $region48
        $region47: #{tpu_custom_call.1} parent=11 // pred_region
          %s579 = ssub.s32 16, 16
          %580 = vsyncadd [#allocation24], %s579
          %s582 = sshll.u32 [#allocation25], 4
          %s583 = int_to_ptr.vmem [resolvable:$true] %s582
          %585 = dma.hbm_to_vmem [thread:$0]  %s12, 16, %s583, [#allocation24]
        $region48: #{tpu_custom_call.1} parent=11 // pred_fallthru
          _
        // Predicated region
        $region49: #{tpu_custom_call.1} parent=11 // pred_check
          %p586 = pneg %p371
        $region50: #{tpu_custom_call.1} parent=11 // pred_check_branch
          %588 = sbr.rel (%p586) target = $region52
        $region51: #{tpu_custom_call.1} parent=11 // pred_region
          %s590 = ssub.s32 1024, 1024
          %591 = vsyncadd [#allocation27], %s590
          %s592 = sshll.u32 [#allocation26], 4
          %s593 = int_to_ptr.vmem [resolvable:$true] %s592
          %598 = dma.hbm_to_vmem [thread:$0]  %s13, 1024, %s593, [#allocation27], 64, 64, 4
        $region52: #{tpu_custom_call.1} parent=11 // pred_fallthru
          _
        // Predicated region
        $region53: #{tpu_custom_call.1} parent=11 // pred_check
          %p599 = pneg %p392
        $region54: #{tpu_custom_call.1} parent=11 // pred_check_branch
          %601 = sbr.rel (%p599) target = $region56
        $region55: #{tpu_custom_call.1} parent=11 // pred_region
          %s603 = ssub.s32 16, 16
          %604 = vsyncadd [#allocation27], %s603
          %s606 = sshll.u32 [#allocation28], 4
          %s607 = int_to_ptr.vmem [resolvable:$true] %s606
          %609 = dma.hbm_to_vmem [thread:$0]  %s14, 16, %s607, [#allocation27]
        $region56: #{tpu_custom_call.1} parent=11 // pred_fallthru
          _
        // Predicated region
        $region57: #{tpu_custom_call.1} parent=11 // pred_check
          %p610 = pneg %p413
        $region58: #{tpu_custom_call.1} parent=11 // pred_check_branch
          %612 = sbr.rel (%p610) target = $region60
        $region59: #{tpu_custom_call.1} parent=11 // pred_region
          %s614 = ssub.s32 16, 16
          %615 = vsyncadd [#allocation30], %s614
          %s617 = sshll.u32 [#allocation29], 4
          %s618 = int_to_ptr.vmem [resolvable:$true] %s617
          %620 = dma.hbm_to_vmem [thread:$0]  %s15, 16, %s618, [#allocation30]
        $region60: #{tpu_custom_call.1} parent=11 // pred_fallthru
          _
        // Predicated region
        $region61: #{tpu_custom_call.1} parent=11 // pred_check
          %p621 = pneg %p434
        $region62: #{tpu_custom_call.1} parent=11 // pred_check_branch
          %623 = sbr.rel (%p621) target = $region64
        $region63: #{tpu_custom_call.1} parent=11 // pred_region
          %s625 = ssub.s32 16, 16
          %626 = vsyncadd [#allocation30], %s625
          %s628 = sshll.u32 [#allocation31], 4
          %s629 = int_to_ptr.vmem [resolvable:$true] %s628
          %631 = dma.hbm_to_vmem [thread:$0]  %s16, 16, %s629, [#allocation30]
        $region64: #{tpu_custom_call.1} parent=11 // pred_fallthru
          _
      $region12: #{tpu_custom_call.1} parent=5 // pred_fallthru
        _
      %p632 = scmp.lt.s32.totalorder %s41, 2
      // Predicated region
      $region65: #{tpu_custom_call.1} parent=5 // pred_check
        %p633 = pneg %p632
      $region66: #{tpu_custom_call.1} parent=5 // pred_check_branch
        %635 = sbr.rel (%p633) target = $region68
      $region67: #{tpu_custom_call.1} parent=5 // pred_region
        // Predicated region
        $region69: #{tpu_custom_call.1} parent=67 // pred_check
          %p636 = pneg %p73
        $region70: #{tpu_custom_call.1} parent=67 // pred_check_branch
          %638 = sbr.rel (%p636) target = $region72
        $region71: #{tpu_custom_call.1} parent=67 // pred_region
          %s639 = sand.u32 %s63, 1
          %s640 = scalar_lea.sflag [#allocation6], %s639
          %s641 = sand.u32 %s63, 1
          %s642 = smul.addr %s641, 4
          %s643 = scalar_lea.vmem [#allocation5], %s642
          %s645 = ssub.s32 64, 64
          %646 = vsyncadd %s640, %s645
          %s647 = smul.addr %s48, 64
          %s648 = scalar_lea.hbm %s0, %s647
          %s650 = sshll.u32 %s643, 4
          %s651 = int_to_ptr.vmem [resolvable:$true] %s650
          %653 = dma.hbm_to_vmem [thread:$0]  %s648, 64, %s651, %s640
        $region72: #{tpu_custom_call.1} parent=67 // pred_fallthru
          _
        // Predicated region
        $region73: #{tpu_custom_call.1} parent=67 // pred_check
          %p654 = pneg %p99
        $region74: #{tpu_custom_call.1} parent=67 // pred_check_branch
          %656 = sbr.rel (%p654) target = $region76
        $region75: #{tpu_custom_call.1} parent=67 // pred_region
          %s657 = sand.u32 %s41, 1
          %s658 = scalar_lea.sflag [#allocation9], %s657
          %s659 = sand.u32 %s89, 1
          %s660 = smul.addr %s659, 4
          %s661 = scalar_lea.vmem [#allocation8], %s660
          %s663 = ssub.s32 64, 64
          %664 = vsyncadd %s658, %s663
          %s665 = smul.addr %s48, 64
          %s666 = scalar_lea.hbm %s1, %s665
          %s668 = sshll.u32 %s661, 4
          %s669 = int_to_ptr.vmem [resolvable:$true] %s668
          %671 = dma.hbm_to_vmem [thread:$0]  %s666, 64, %s669, %s658
        $region76: #{tpu_custom_call.1} parent=67 // pred_fallthru
          _
        // Predicated region
        $region77: #{tpu_custom_call.1} parent=67 // pred_check
          %p672 = pneg %p127
        $region78: #{tpu_custom_call.1} parent=67 // pred_check_branch
          %674 = sbr.rel (%p672) target = $region80
        $region79: #{tpu_custom_call.1} parent=67 // pred_region
          %s675 = sand.u32 %s41, 1
          %s676 = scalar_lea.sflag [#allocation9], %s675
          %s677 = sand.u32 %s117, 1
          %s678 = smul.addr %s677, 8
          %s679 = scalar_lea.vmem [#allocation10], %s678
          %s681 = ssub.s32 128, 128
          %682 = vsyncadd %s676, %s681
          %s683 = sadd.s32 %s49, %s48
          %s684 = smul.addr %s683, 128
          %s685 = scalar_lea.hbm %s2, %s684
          %s687 = sshll.u32 %s679, 4
          %s688 = int_to_ptr.vmem [resolvable:$true] %s687
          %690 = dma.hbm_to_vmem [thread:$0]  %s685, 128, %s688, %s676
        $region80: #{tpu_custom_call.1} parent=67 // pred_fallthru
          _
        // Predicated region
        $region81: #{tpu_custom_call.1} parent=67 // pred_check
          %p691 = pneg %p155
        $region82: #{tpu_custom_call.1} parent=67 // pred_check_branch
          %693 = sbr.rel (%p691) target = $region84
        $region83: #{tpu_custom_call.1} parent=67 // pred_region
          %s694 = sand.u32 %s41, 1
          %s695 = scalar_lea.sflag [#allocation12], %s694
          %s696 = sand.u32 %s145, 1
          %s697 = smul.addr %s696, 4
          %s698 = scalar_lea.vmem [#allocation11], %s697
          %s700 = ssub.s32 64, 64
          %701 = vsyncadd %s695, %s700
          %s702 = sadd.s32 %s49, %s48
          %s703 = smul.addr %s702, 64
          %s704 = scalar_lea.hbm %s3, %s703
          %s706 = sshll.u32 %s698, 4
          %s707 = int_to_ptr.vmem [resolvable:$true] %s706
          %709 = dma.hbm_to_vmem [thread:$0]  %s704, 64, %s707, %s695
        $region84: #{tpu_custom_call.1} parent=67 // pred_fallthru
          _
      $region68: #{tpu_custom_call.1} parent=5 // pred_fallthru
        _
      %p710 = scmp.le.s32.totalorder 1, %s41
      %p711 = scmp.lt.s32.totalorder %s41, 3
      %p712 = pnand %p710, %p711
      %p713 = pneg %p712
      // Predicated region
      $region85: #{tpu_custom_call.1} parent=5 // pred_check
        _
      $region86: #{tpu_custom_call.1} parent=5 // pred_check_branch
        %715 = sbr.rel (%p712) target = $region88
      $region87: #{tpu_custom_call.1} parent=5 // pred_region
        %s716 = ssub.s32 %s41, 1
        %s717 = sand.u32 %s66, 1
        %s718 = scalar_lea.sflag [#allocation6], %s717
        %s719 = sand.u32 %s66, 1
        %s720 = smul.addr %s719, 4
        %s721 = scalar_lea.vmem [#allocation5], %s720
        // Predicated region
        $region89: #{tpu_custom_call.1} parent=87 // pred_check
          %p722 = pneg %p79
        $region90: #{tpu_custom_call.1} parent=87 // pred_check_branch
          %724 = sbr.rel (%p722) target = $region92
        $region91: #{tpu_custom_call.1} parent=87 // pred_region
          %725 = dma.done %s718, 64
        $region92: #{tpu_custom_call.1} parent=87 // pred_fallthru
          _
        %s726 = sand.u32 %s46, 1
        %s727 = scalar_lea.sflag [#allocation9], %s726
        %s728 = sand.u32 %s92, 1
        %s729 = smul.addr %s728, 4
        %s730 = scalar_lea.vmem [#allocation8], %s729
        // Predicated region
        $region93: #{tpu_custom_call.1} parent=87 // pred_check
          %p731 = pneg %p105
        $region94: #{tpu_custom_call.1} parent=87 // pred_check_branch
          %733 = sbr.rel (%p731) target = $region96
        $region95: #{tpu_custom_call.1} parent=87 // pred_region
          %734 = dma.done %s727, 64
        $region96: #{tpu_custom_call.1} parent=87 // pred_fallthru
          _
        %s735 = sand.u32 %s46, 1
        %s736 = scalar_lea.sflag [#allocation9], %s735
        %s737 = sand.u32 %s120, 1
        %s738 = smul.addr %s737, 8
        %s739 = scalar_lea.vmem [#allocation10], %s738
        // Predicated region
        $region97: #{tpu_custom_call.1} parent=87 // pred_check
          %p740 = pneg %p133
        $region98: #{tpu_custom_call.1} parent=87 // pred_check_branch
          %742 = sbr.rel (%p740) target = $region100
        $region99: #{tpu_custom_call.1} parent=87 // pred_region
          %743 = dma.done %s736, 128
        $region100: #{tpu_custom_call.1} parent=87 // pred_fallthru
          _
        %s744 = sand.u32 %s46, 1
        %s745 = scalar_lea.sflag [#allocation12], %s744
        %s746 = sand.u32 %s148, 1
        %s747 = smul.addr %s746, 4
        %s748 = scalar_lea.vmem [#allocation11], %s747
        // Predicated region
        $region101: #{tpu_custom_call.1} parent=87 // pred_check
          %p749 = pneg %p161
        $region102: #{tpu_custom_call.1} parent=87 // pred_check_branch
          %751 = sbr.rel (%p749) target = $region104
        $region103: #{tpu_custom_call.1} parent=87 // pred_region
          %752 = dma.done %s745, 64
        $region104: #{tpu_custom_call.1} parent=87 // pred_fallthru
          _
        // Predicated region
        $region105: #{tpu_custom_call.1} parent=87 // pred_check
          %p753 = pneg %p182
        $region106: #{tpu_custom_call.1} parent=87 // pred_check_branch
          %755 = sbr.rel (%p753) target = $region108
        $region107: #{tpu_custom_call.1} parent=87 // pred_region
          %756 = dma.done [#allocation12], 256
        $region108: #{tpu_custom_call.1} parent=87 // pred_fallthru
          _
        // Predicated region
        $region109: #{tpu_custom_call.1} parent=87 // pred_check
          %p757 = pneg %p203
        $region110: #{tpu_custom_call.1} parent=87 // pred_check_branch
          %759 = sbr.rel (%p757) target = $region112
        $region111: #{tpu_custom_call.1} parent=87 // pred_region
          %760 = dma.done [#allocation15], 256
        $region112: #{tpu_custom_call.1} parent=87 // pred_fallthru
          _
        // Predicated region
        $region113: #{tpu_custom_call.1} parent=87 // pred_check
          %p761 = pneg %p224
        $region114: #{tpu_custom_call.1} parent=87 // pred_check_branch
          %763 = sbr.rel (%p761) target = $region116
        $region115: #{tpu_custom_call.1} parent=87 // pred_region
          %764 = dma.done [#allocation15], 256
        $region116: #{tpu_custom_call.1} parent=87 // pred_fallthru
          _
        // Predicated region
        $region117: #{tpu_custom_call.1} parent=87 // pred_check
          %p765 = pneg %p245
        $region118: #{tpu_custom_call.1} parent=87 // pred_check_branch
          %767 = sbr.rel (%p765) target = $region120
        $region119: #{tpu_custom_call.1} parent=87 // pred_region
          %768 = dma.done [#allocation18], 256
        $region120: #{tpu_custom_call.1} parent=87 // pred_fallthru
          _
        // Predicated region
        $region121: #{tpu_custom_call.1} parent=87 // pred_check
          %p769 = pneg %p266
        $region122: #{tpu_custom_call.1} parent=87 // pred_check_branch
          %771 = sbr.rel (%p769) target = $region124
        $region123: #{tpu_custom_call.1} parent=87 // pred_region
          %772 = dma.done [#allocation18], 16
        $region124: #{tpu_custom_call.1} parent=87 // pred_fallthru
          _
        // Predicated region
        $region125: #{tpu_custom_call.1} parent=87 // pred_check
          %p773 = pneg %p287
        $region126: #{tpu_custom_call.1} parent=87 // pred_check_branch
          %775 = sbr.rel (%p773) target = $region128
        $region127: #{tpu_custom_call.1} parent=87 // pred_region
          %776 = dma.done [#allocation21], 16
        $region128: #{tpu_custom_call.1} parent=87 // pred_fallthru
          _
        // Predicated region
        $region129: #{tpu_custom_call.1} parent=87 // pred_check
          %p777 = pneg %p308
        $region130: #{tpu_custom_call.1} parent=87 // pred_check_branch
          %779 = sbr.rel (%p777) target = $region132
        $region131: #{tpu_custom_call.1} parent=87 // pred_region
          %780 = dma.done [#allocation21], 16
        $region132: #{tpu_custom_call.1} parent=87 // pred_fallthru
          _
        // Predicated region
        $region133: #{tpu_custom_call.1} parent=87 // pred_check
          %p781 = pneg %p329
        $region134: #{tpu_custom_call.1} parent=87 // pred_check_branch
          %783 = sbr.rel (%p781) target = $region136
        $region135: #{tpu_custom_call.1} parent=87 // pred_region
          %784 = dma.done [#allocation24], 256
        $region136: #{tpu_custom_call.1} parent=87 // pred_fallthru
          _
        // Predicated region
        $region137: #{tpu_custom_call.1} parent=87 // pred_check
          %p785 = pneg %p350
        $region138: #{tpu_custom_call.1} parent=87 // pred_check_branch
          %787 = sbr.rel (%p785) target = $region140
        $region139: #{tpu_custom_call.1} parent=87 // pred_region
          %788 = dma.done [#allocation24], 16
        $region140: #{tpu_custom_call.1} parent=87 // pred_fallthru
          _
        // Predicated region
        $region141: #{tpu_custom_call.1} parent=87 // pred_check
          %p789 = pneg %p371
        $region142: #{tpu_custom_call.1} parent=87 // pred_check_branch
          %791 = sbr.rel (%p789) target = $region144
        $region143: #{tpu_custom_call.1} parent=87 // pred_region
          %792 = dma.done [#allocation27], 1024
        $region144: #{tpu_custom_call.1} parent=87 // pred_fallthru
          _
        // Predicated region
        $region145: #{tpu_custom_call.1} parent=87 // pred_check
          %p793 = pneg %p392
        $region146: #{tpu_custom_call.1} parent=87 // pred_check_branch
          %795 = sbr.rel (%p793) target = $region148
        $region147: #{tpu_custom_call.1} parent=87 // pred_region
          %796 = dma.done [#allocation27], 16
        $region148: #{tpu_custom_call.1} parent=87 // pred_fallthru
          _
        // Predicated region
        $region149: #{tpu_custom_call.1} parent=87 // pred_check
          %p797 = pneg %p413
        $region150: #{tpu_custom_call.1} parent=87 // pred_check_branch
          %799 = sbr.rel (%p797) target = $region152
        $region151: #{tpu_custom_call.1} parent=87 // pred_region
          %800 = dma.done [#allocation30], 16
        $region152: #{tpu_custom_call.1} parent=87 // pred_fallthru
          _
        // Predicated region
        $region153: #{tpu_custom_call.1} parent=87 // pred_check
          %p801 = pneg %p434
        $region154: #{tpu_custom_call.1} parent=87 // pred_check_branch
          %803 = sbr.rel (%p801) target = $region156
        $region155: #{tpu_custom_call.1} parent=87 // pred_region
          %804 = dma.done [#allocation30], 16
        $region156: #{tpu_custom_call.1} parent=87 // pred_fallthru
          _
        %s805 = sand.u32 %s66, 1
        %s806 = scalar_lea.sflag [#allocation6], %s805
        %s807 = sand.u32 %s66, 1
        %s808 = smul.addr %s807, 4
        %s809 = scalar_lea.vmem [#allocation5], %s808
        %p810 = pneg %p79
        %p811 = pneg %p76
        %s812 = sand.u32 %s46, 1
        %s813 = scalar_lea.sflag [#allocation9], %s812
        %s814 = sand.u32 %s92, 1
        %s815 = smul.addr %s814, 4
        %s816 = scalar_lea.vmem [#allocation8], %s815
        %p817 = pneg %p105
        %p818 = pneg %p102
        %s819 = sand.u32 %s46, 1
        %s820 = scalar_lea.sflag [#allocation9], %s819
        %s821 = sand.u32 %s120, 1
        %s822 = smul.addr %s821, 8
        %s823 = scalar_lea.vmem [#allocation10], %s822
        %p824 = pneg %p133
        %p825 = pneg %p130
        %s826 = sand.u32 %s46, 1
        %s827 = scalar_lea.sflag [#allocation12], %s826
        %s828 = sand.u32 %s148, 1
        %s829 = smul.addr %s828, 4
        %s830 = scalar_lea.vmem [#allocation11], %s829
        %p831 = pneg %p161
        %p832 = pneg %p158
        %p833 = pneg %p182
        %p834 = pneg %p179
        %p835 = pneg %p203
        %p836 = pneg %p200
        %p837 = pneg %p224
        %p838 = pneg %p221
        %p839 = pneg %p245
        %p840 = pneg %p242
        %p841 = pneg %p266
        %p842 = pneg %p263
        %p843 = pneg %p287
        %p844 = pneg %p284
        %p845 = pneg %p308
        %p846 = pneg %p305
        %p847 = pneg %p329
        %p848 = pneg %p326
        %p849 = pneg %p350
        %p850 = pneg %p347
        %p851 = pneg %p371
        %p852 = pneg %p368
        %p853 = pneg %p392
        %p854 = pneg %p389
        %p855 = pneg %p413
        %p856 = pneg %p410
        %p857 = pneg %p434
        %p858 = pneg %p431
        %p859 = pneg %p462
        %p860 = pneg %p459
        %s861 = sand.u32 %s449, 1
        %s862 = scalar_lea.sflag [#allocation7], %s861
        %s863 = sand.u32 %s449, 1
        %s864 = smul.addr %s863, 8
        %s865 = scalar_lea.vmem [#allocation32], %s864
        %p867 = scmp.eq.s32.totalorder %s51, 0
        // Predicated region
        $region157: #{tpu_custom_call.1} parent=87 // pred_check
          %p868 = pneg %p867
        $region158: #{tpu_custom_call.1} parent=87 // pred_check_branch
          %870 = sbr.rel (%p868) target = $region160
        $region159: #{tpu_custom_call.1} parent=87 // pred_region
          %v871 = vld [vmem:[%s730] sm:$0xf]
          %v872 = vld [vmem:[%s721] sm:$0xf]
          %v873 = vld [vmem:[#allocation14] sm:$0xf]
          %v874 = vld [vmem:[#allocation14 + $0x4] sm:$0xf]
          %v875 = vld [vmem:[#allocation14 + $0x8] sm:$0xf]
          %v876 = vld [vmem:[#allocation14 + $0xc] sm:$0xf]
          %v881 = vunpack.c.l.b16 %v873
          %v882 = vunpack.c.l.b16 %v874
          %v883 = vunpack.c.l.b16 %v875
          %v884 = vunpack.c.l.b16 %v876
          %v885 = vpack.c.b16 %v882, %v881
          %v886 = vpack.c.b16 %v884, %v883
          %vm889 = vcmask 261120
          %v891 = vsel %vm889, %v871, 0
          %893 = vmatprep.subr.bf16.mxu0 0
          %894 = vmatpush1.bf16.msra.mxu0 %v885
          %895 = vmatprep.subr.bf16.mxu0 0
          %896 = vmatpush1.bf16.msra.mxu0 %v886
          %897 = vmatprep.subr.bf16.mxu0 0
          %898 = vmatpush1.bf16.msra.mxu0 0
          %899 = vmatprep.subr.bf16.mxu0 0
          %900 = vmatpush1.bf16.msra.mxu0 0
          %901 = vmatprep.subr.bf16.mxu0 0
          %902 = vmatpush1.bf16.msra.mxu0 0
          %903 = vmatprep.subr.bf16.mxu0 0
          %904 = vmatpush1.bf16.msra.mxu0 0
          %905 = vmatprep.subr.bf16.mxu0 0
          %906 = vmatpush1.bf16.msra.mxu0 0
          %907 = vmatprep.subr.bf16.mxu0 0
          %908 = vmatpush1.bf16.msra.mxu0 0
          %909 = vmatprep.subr.bf16.mxu0 0
          %910 = vmatpush1.bf16.msra.mxu0 0
          %911 = vmatprep.subr.bf16.mxu0 0
          %912 = vmatpush1.bf16.msra.mxu0 0
          %913 = vmatprep.subr.bf16.mxu0 0
          %914 = vmatpush1.bf16.msra.mxu0 0
          %915 = vmatprep.subr.bf16.mxu0 0
          %916 = vmatpush1.bf16.msra.mxu0 0
          %917 = vmatprep.subr.bf16.mxu0 0
          %918 = vmatpush1.bf16.msra.mxu0 0
          %919 = vmatprep.subr.bf16.mxu0 0
          %920 = vmatpush1.bf16.msra.mxu0 0
          %921 = vmatprep.subr.bf16.mxu0 0
          %922 = vmatpush1.bf16.msra.mxu0 0
          %923 = vmatprep.subr.bf16.mxu0 0
          %924 = vmatpush1.bf16.msra.mxu0 0
          %925 = vmatprep.mubr.bf16.mxu0 0
          %926 = vmatmul.mubr.bf16.gmra.mrb[0].mxu0 %v891
          %v927 = vpop.f32.mrb[0].mxu0
          %v928 = vadd.f32 0.0, %v927
          %v929 = vpop.f32.mrb[0].mxu0
          %v930 = vpop.f32.mrb[0].mxu0
          %v931 = vpop.f32.mrb[0].mxu0
          %932 = vdwg.mxu0
          %v933 = vpack.c.bf16 %v928, %v928
          %vm934 = vcmask 257024
          %935 = vst.msk [vmem:[#allocation2] sm:$0xf] %vm934, %v933
          %v936 = vld [vmem:[#allocation13] sm:$0xf]
          %v937 = vld [vmem:[#allocation13 + $0x4] sm:$0xf]
          %v938 = vld [vmem:[#allocation13 + $0x8] sm:$0xf]
          %v939 = vld [vmem:[#allocation13 + $0xc] sm:$0xf]
          %v944 = vunpack.c.l.b16 %v936
          %v945 = vunpack.c.l.b16 %v937
          %v946 = vunpack.c.l.b16 %v938
          %v947 = vunpack.c.l.b16 %v939
          %v948 = vpack.c.b16 %v945, %v944
          %v949 = vpack.c.b16 %v947, %v946
          %v953 = vsel %vm889, %v872, 0
          %955 = vmatprep.subr.bf16.mxu0 0
          %956 = vmatpush1.bf16.msra.mxu0 %v948
          %957 = vmatprep.subr.bf16.mxu0 0
          %958 = vmatpush1.bf16.msra.mxu0 %v949
          %959 = vmatprep.subr.bf16.mxu0 0
          %960 = vmatpush1.bf16.msra.mxu0 0
          %961 = vmatprep.subr.bf16.mxu0 0
          %962 = vmatpush1.bf16.msra.mxu0 0
          %963 = vmatprep.subr.bf16.mxu0 0
          %964 = vmatpush1.bf16.msra.mxu0 0
          %965 = vmatprep.subr.bf16.mxu0 0
          %966 = vmatpush1.bf16.msra.mxu0 0
          %967 = vmatprep.subr.bf16.mxu0 0
          %968 = vmatpush1.bf16.msra.mxu0 0
          %969 = vmatprep.subr.bf16.mxu0 0
          %970 = vmatpush1.bf16.msra.mxu0 0
          %971 = vmatprep.subr.bf16.mxu0 0
          %972 = vmatpush1.bf16.msra.mxu0 0
          %973 = vmatprep.subr.bf16.mxu0 0
          %974 = vmatpush1.bf16.msra.mxu0 0
          %975 = vmatprep.subr.bf16.mxu0 0
          %976 = vmatpush1.bf16.msra.mxu0 0
          %977 = vmatprep.subr.bf16.mxu0 0
          %978 = vmatpush1.bf16.msra.mxu0 0
          %979 = vmatprep.subr.bf16.mxu0 0
          %980 = vmatpush1.bf16.msra.mxu0 0
          %981 = vmatprep.subr.bf16.mxu0 0
          %982 = vmatpush1.bf16.msra.mxu0 0
          %983 = vmatprep.subr.bf16.mxu0 0
          %984 = vmatpush1.bf16.msra.mxu0 0
          %985 = vmatprep.subr.bf16.mxu0 0
          %986 = vmatpush1.bf16.msra.mxu0 0
          %987 = vmatprep.mubr.bf16.mxu0 0
          %988 = vmatmul.mubr.bf16.gmra.mrb[0].mxu0 %v953
          %v989 = vpop.f32.mrb[0].mxu0
          %v990 = vadd.f32 0.0, %v989
          %v991 = vpop.f32.mrb[0].mxu0
          %v992 = vpop.f32.mrb[0].mxu0
          %v993 = vpop.f32.mrb[0].mxu0
          %994 = vdwg.mxu0
          %v995 = vpack.c.bf16 %v990, %v990
          %996 = vst.msk [vmem:[#allocation3] sm:$0xf] %vm934, %v995
        $region160: #{tpu_custom_call.1} parent=87 // pred_fallthru
          _
        %v997 = vld [vmem:[%s739] sm:$0xff]
        %v998 = vld [vmem:[%s748] sm:$0xf]
        %v999 = vunpack.c.l.bf16 %v998
        %v1000 = vpack.c.bf16 %v997, %v997
        %v1001 = vld [vmem:[#allocation16] sm:$0xf]
        %v1002 = vld [vmem:[#allocation16 + $0x4] sm:$0xf]
        %v1003 = vld [vmem:[#allocation16 + $0x8] sm:$0xf]
        %v1004 = vld [vmem:[#allocation16 + $0xc] sm:$0xf]
        %v1009 = vunpack.c.l.b16 %v1001
        %v1010 = vunpack.c.l.b16 %v1002
        %v1011 = vunpack.c.l.b16 %v1003
        %v1012 = vunpack.c.l.b16 %v1004
        %v1013 = vpack.c.b16 %v1010, %v1009
        %v1014 = vpack.c.b16 %v1012, %v1011
        %vm1017 = vcmask 261120
        %v1019 = vsel %vm1017, %v1000, 0
        %1021 = vmatprep.subr.bf16.mxu0 0
        %1022 = vmatpush1.bf16.msra.mxu0 %v1013
        %1023 = vmatprep.subr.bf16.mxu0 0
        %1024 = vmatpush1.bf16.msra.mxu0 %v1014
        %1025 = vmatprep.subr.bf16.mxu0 0
        %1026 = vmatpush1.bf16.msra.mxu0 0
        %1027 = vmatprep.subr.bf16.mxu0 0
        %1028 = vmatpush1.bf16.msra.mxu0 0
        %1029 = vmatprep.subr.bf16.mxu0 0
        %1030 = vmatpush1.bf16.msra.mxu0 0
        %1031 = vmatprep.subr.bf16.mxu0 0
        %1032 = vmatpush1.bf16.msra.mxu0 0
        %1033 = vmatprep.subr.bf16.mxu0 0
        %1034 = vmatpush1.bf16.msra.mxu0 0
        %1035 = vmatprep.subr.bf16.mxu0 0
        %1036 = vmatpush1.bf16.msra.mxu0 0
        %1037 = vmatprep.subr.bf16.mxu0 0
        %1038 = vmatpush1.bf16.msra.mxu0 0
        %1039 = vmatprep.subr.bf16.mxu0 0
        %1040 = vmatpush1.bf16.msra.mxu0 0
        %1041 = vmatprep.subr.bf16.mxu0 0
        %1042 = vmatpush1.bf16.msra.mxu0 0
        %1043 = vmatprep.subr.bf16.mxu0 0
        %1044 = vmatpush1.bf16.msra.mxu0 0
        %1045 = vmatprep.subr.bf16.mxu0 0
        %1046 = vmatpush1.bf16.msra.mxu0 0
        %1047 = vmatprep.subr.bf16.mxu0 0
        %1048 = vmatpush1.bf16.msra.mxu0 0
        %1049 = vmatprep.subr.bf16.mxu0 0
        %1050 = vmatpush1.bf16.msra.mxu0 0
        %1051 = vmatprep.subr.bf16.mxu0 0
        %1052 = vmatpush1.bf16.msra.mxu0 0
        %1053 = vmatprep.mubr.bf16.mxu0 0
        %1054 = vmatmul.mubr.bf16.gmra.mrb[0].mxu0 %v1019
        %v1055 = vpop.f32.mrb[0].mxu0
        %v1056 = vadd.f32 0.0, %v1055
        %v1057 = vpop.f32.mrb[0].mxu0
        %v1058 = vpop.f32.mrb[0].mxu0
        %v1059 = vpop.f32.mrb[0].mxu0
        %1060 = vdwg.mxu0
        %v1061 = vmul.f32 %v1056, 0.17677669
        %v1062 = vpack.c.bf16 %v1061, %v1061
        %v1063 = vld [vmem:[#allocation2] sm:$0xf]
        %v1064 = vld [vmem:[#allocation3] sm:$0xf]
        %vm1065 = vcmask 64512
        %v1067 = vsel %vm1065, %v1062, 0
        %v1070 = vsel %vm1065, %v1063, 0
        %1072 = vmatprep.subr.bf16.mxu0 0
        %1073 = vmatpush1.bf16.xpose.msra.mxu0 %v1070
        %1074 = vmatprep.subr.bf16.mxu0 0
        %1075 = vmatpush1.bf16.xpose.msra.mxu0 0
        %1076 = vmatprep.subr.bf16.mxu0 0
        %1077 = vmatpush1.bf16.xpose.msra.mxu0 0
        %1078 = vmatprep.subr.bf16.mxu0 0
        %1079 = vmatpush1.bf16.xpose.msra.mxu0 0
        %1080 = vmatprep.subr.bf16.mxu0 0
        %1081 = vmatpush1.bf16.xpose.msra.mxu0 0
        %1082 = vmatprep.subr.bf16.mxu0 0
        %1083 = vmatpush1.bf16.xpose.msra.mxu0 0
        %1084 = vmatprep.subr.bf16.mxu0 0
        %1085 = vmatpush1.bf16.xpose.msra.mxu0 0
        %1086 = vmatprep.subr.bf16.mxu0 0
        %1087 = vmatpush1.bf16.xpose.msra.mxu0 0
        %1088 = vmatprep.subr.bf16.mxu0 0
        %1089 = vmatpush1.bf16.xpose.msra.mxu0 0
        %1090 = vmatprep.subr.bf16.mxu0 0
        %1091 = vmatpush1.bf16.xpose.msra.mxu0 0
        %1092 = vmatprep.subr.bf16.mxu0 0
        %1093 = vmatpush1.bf16.xpose.msra.mxu0 0
        %1094 = vmatprep.subr.bf16.mxu0 0
        %1095 = vmatpush1.bf16.xpose.msra.mxu0 0
        %1096 = vmatprep.subr.bf16.mxu0 0
        %1097 = vmatpush1.bf16.xpose.msra.mxu0 0
        %1098 = vmatprep.subr.bf16.mxu0 0
        %1099 = vmatpush1.bf16.xpose.msra.mxu0 0
        %1100 = vmatprep.subr.bf16.mxu0 0
        %1101 = vmatpush1.bf16.xpose.msra.mxu0 0
        %1102 = vmatprep.subr.bf16.mxu0 0
        %1103 = vmatpush1.bf16.xpose.msra.mxu0 0
        %1104 = vmatprep.mubr.bf16.mxu0 0
        %1105 = vmatmul.mubr.bf16.gmra.mrb[0].mxu0 %v1067
        %v1106 = vpop.f32.mrb[0].mxu0
        %v1107 = vadd.f32 %v999, %v1106
        %v1108 = vpop.f32.mrb[0].mxu0
        %v1109 = vpop.f32.mrb[0].mxu0
        %v1110 = vpop.f32.mrb[0].mxu0
        %1111 = vdwg.mxu0
        %v1112 = vsel %vm1065, %v1107, -inf
        %1113 = vmax.xlane.f32.xlu0 %v1112
        %v1114 = vpop.xlane.xlu0 %1113
        %v1115 = vsub.f32 %v1107, %v1114
        %v1116 = vmul.f32 %v1115, 1.442695
        %v1117 = vpow.pop %v1116
        %v1118 = vsel %vm1065, %v1117, 0.0
        %1119 = vadd.xlane.f32.xlu0 %v1118
        %v1120 = vpop.xlane.xlu0 %1119
        %v1121 = vrcp.pop %v1120
        %v1122 = vmul.f32 %v1117, %v1121
        %v1123 = vpack.c.bf16 %v1122, %v1122
        %v1125 = vsel %vm1065, %v1123, 0
        %vm1127 = vcmask 1043456
        %v1129 = vsel %vm1127, %v1064, 0
        %1131 = vmatprep.subr.bf16.mxu0 0
        %1132 = vmatpush1.bf16.msra.mxu0 %v1129
        %1133 = vmatprep.subr.bf16.mxu0 0
        %1134 = vmatpush1.bf16.msra.mxu0 0
        %1135 = vmatprep.subr.bf16.mxu0 0
        %1136 = vmatpush1.bf16.msra.mxu0 0
        %1137 = vmatprep.subr.bf16.mxu0 0
        %1138 = vmatpush1.bf16.msra.mxu0 0
        %1139 = vmatprep.subr.bf16.mxu0 0
        %1140 = vmatpush1.bf16.msra.mxu0 0
        %1141 = vmatprep.subr.bf16.mxu0 0
        %1142 = vmatpush1.bf16.msra.mxu0 0
        %1143 = vmatprep.subr.bf16.mxu0 0
        %1144 = vmatpush1.bf16.msra.mxu0 0
        %1145 = vmatprep.subr.bf16.mxu0 0
        %1146 = vmatpush1.bf16.msra.mxu0 0
        %1147 = vmatprep.subr.bf16.mxu0 0
        %1148 = vmatpush1.bf16.msra.mxu0 0
        %1149 = vmatprep.subr.bf16.mxu0 0
        %1150 = vmatpush1.bf16.msra.mxu0 0
        %1151 = vmatprep.subr.bf16.mxu0 0
        %1152 = vmatpush1.bf16.msra.mxu0 0
        %1153 = vmatprep.subr.bf16.mxu0 0
        %1154 = vmatpush1.bf16.msra.mxu0 0
        %1155 = vmatprep.subr.bf16.mxu0 0
        %1156 = vmatpush1.bf16.msra.mxu0 0
        %1157 = vmatprep.subr.bf16.mxu0 0
        %1158 = vmatpush1.bf16.msra.mxu0 0
        %1159 = vmatprep.subr.bf16.mxu0 0
        %1160 = vmatpush1.bf16.msra.mxu0 0
        %1161 = vmatprep.subr.bf16.mxu0 0
        %1162 = vmatpush1.bf16.msra.mxu0 0
        %1163 = vmatprep.mubr.bf16.mxu0 0
        %1164 = vmatmul.mubr.bf16.gmra.mrb[0].mxu0 %v1125
        %v1165 = vpop.f32.mrb[0].mxu0
        %v1166 = vadd.f32 0.0, %v1165
        %v1167 = vpop.f32.mrb[0].mxu0
        %v1168 = vpop.f32.mrb[0].mxu0
        %v1169 = vpop.f32.mrb[0].mxu0
        %1170 = vdwg.mxu0
        %v1171 = vpack.c.bf16 %v1166, %v1166
        %vm1172 = vcmask 60416
        %1173 = vst.msk [vmem:[#allocation4] sm:$0xf] %vm1172, %v1171
        %v1174 = vld [vmem:[#allocation2] sm:$0xf]
        %v1175 = vld [vmem:[#allocation3] sm:$0xf]
        %1177 = vrot.lane.b32.xlu0 %v1062, 120
        %v1178 = vpop.permute.xlu0 %1177
        %v1180 = vunpack.c.l.b16 %v1174
        %v1181 = vpack.c.b16 %v1180, %v1180
        %1182 = vrot.lane.b32.xlu0 %v1181, 120
        %v1183 = vpop.permute.xlu0 %1182
        %v1185 = vsel %vm1065, %v1178, 0
        %v1188 = vsel %vm1065, %v1183, 0
        %1190 = vmatprep.subr.bf16.mxu0 0
        %1191 = vmatpush1.bf16.xpose.msra.mxu0 %v1188
        %1192 = vmatprep.subr.bf16.mxu0 0
        %1193 = vmatpush1.bf16.xpose.msra.mxu0 0
        %1194 = vmatprep.subr.bf16.mxu0 0
        %1195 = vmatpush1.bf16.xpose.msra.mxu0 0
        %1196 = vmatprep.subr.bf16.mxu0 0
        %1197 = vmatpush1.bf16.xpose.msra.mxu0 0
        %1198 = vmatprep.subr.bf16.mxu0 0
        %1199 = vmatpush1.bf16.xpose.msra.mxu0 0
        %1200 = vmatprep.subr.bf16.mxu0 0
        %1201 = vmatpush1.bf16.xpose.msra.mxu0 0
        %1202 = vmatprep.subr.bf16.mxu0 0
        %1203 = vmatpush1.bf16.xpose.msra.mxu0 0
        %1204 = vmatprep.subr.bf16.mxu0 0
        %1205 = vmatpush1.bf16.xpose.msra.mxu0 0
        %1206 = vmatprep.subr.bf16.mxu0 0
        %1207 = vmatpush1.bf16.xpose.msra.mxu0 0
        %1208 = vmatprep.subr.bf16.mxu0 0
        %1209 = vmatpush1.bf16.xpose.msra.mxu0 0
        %1210 = vmatprep.subr.bf16.mxu0 0
        %1211 = vmatpush1.bf16.xpose.msra.mxu0 0
        %1212 = vmatprep.subr.bf16.mxu0 0
        %1213 = vmatpush1.bf16.xpose.msra.mxu0 0
        %1214 = vmatprep.subr.bf16.mxu0 0
        %1215 = vmatpush1.bf16.xpose.msra.mxu0 0
        %1216 = vmatprep.subr.bf16.mxu0 0
        %1217 = vmatpush1.bf16.xpose.msra.mxu0 0
        %1218 = vmatprep.subr.bf16.mxu0 0
        %1219 = vmatpush1.bf16.xpose.msra.mxu0 0
        %1220 = vmatprep.subr.bf16.mxu0 0
        %1221 = vmatpush1.bf16.xpose.msra.mxu0 0
        %1222 = vmatprep.mubr.bf16.mxu0 0
        %1223 = vmatmul.mubr.bf16.gmra.mrb[0].mxu0 %v1185
        %v1224 = vpop.f32.mrb[0].mxu0
        %v1225 = vadd.f32 %v999, %v1224
        %v1226 = vpop.f32.mrb[0].mxu0
        %v1227 = vpop.f32.mrb[0].mxu0
        %v1228 = vpop.f32.mrb[0].mxu0
        %1229 = vdwg.mxu0
        %v1230 = vsel %vm1065, %v1225, -inf
        %1231 = vmax.xlane.f32.xlu0 %v1230
        %v1232 = vpop.xlane.xlu0 %1231
        %v1233 = vsub.f32 %v1225, %v1232
        %v1234 = vmul.f32 %v1233, 1.442695
        %v1235 = vpow.pop %v1234
        %v1236 = vsel %vm1065, %v1235, 0.0
        %1237 = vadd.xlane.f32.xlu0 %v1236
        %v1238 = vpop.xlane.xlu0 %1237
        %v1239 = vrcp.pop %v1238
        %v1240 = vmul.f32 %v1235, %v1239
        %v1241 = vpack.c.bf16 %v1240, %v1240
        %v1243 = vunpack.c.l.b16 %v1175
        %v1244 = vpack.c.b16 %v1243, %v1243
        %1245 = vrot.lane.b32.xlu0 %v1244, 120
        %v1246 = vpop.permute.xlu0 %1245
        %v1248 = vsel %vm1065, %v1241, 0
        %v1251 = vsel %vm1127, %v1246, 0
        %1253 = vmatprep.subr.bf16.mxu0 0
        %1254 = vmatpush1.bf16.msra.mxu0 %v1251
        %1255 = vmatprep.subr.bf16.mxu0 0
        %1256 = vmatpush1.bf16.msra.mxu0 0
        %1257 = vmatprep.subr.bf16.mxu0 0
        %1258 = vmatpush1.bf16.msra.mxu0 0
        %1259 = vmatprep.subr.bf16.mxu0 0
        %1260 = vmatpush1.bf16.msra.mxu0 0
        %1261 = vmatprep.subr.bf16.mxu0 0
        %1262 = vmatpush1.bf16.msra.mxu0 0
        %1263 = vmatprep.subr.bf16.mxu0 0
        %1264 = vmatpush1.bf16.msra.mxu0 0
        %1265 = vmatprep.subr.bf16.mxu0 0
        %1266 = vmatpush1.bf16.msra.mxu0 0
        %1267 = vmatprep.subr.bf16.mxu0 0
        %1268 = vmatpush1.bf16.msra.mxu0 0
        %1269 = vmatprep.subr.bf16.mxu0 0
        %1270 = vmatpush1.bf16.msra.mxu0 0
        %1271 = vmatprep.subr.bf16.mxu0 0
        %1272 = vmatpush1.bf16.msra.mxu0 0
        %1273 = vmatprep.subr.bf16.mxu0 0
        %1274 = vmatpush1.bf16.msra.mxu0 0
        %1275 = vmatprep.subr.bf16.mxu0 0
        %1276 = vmatpush1.bf16.msra.mxu0 0
        %1277 = vmatprep.subr.bf16.mxu0 0
        %1278 = vmatpush1.bf16.msra.mxu0 0
        %1279 = vmatprep.subr.bf16.mxu0 0
        %1280 = vmatpush1.bf16.msra.mxu0 0
        %1281 = vmatprep.subr.bf16.mxu0 0
        %1282 = vmatpush1.bf16.msra.mxu0 0
        %1283 = vmatprep.subr.bf16.mxu0 0
        %1284 = vmatpush1.bf16.msra.mxu0 0
        %1285 = vmatprep.mubr.bf16.mxu0 0
        %1286 = vmatmul.mubr.bf16.gmra.mrb[0].mxu0 %v1248
        %v1287 = vpop.f32.mrb[0].mxu0
        %v1288 = vadd.f32 0.0, %v1287
        %v1289 = vpop.f32.mrb[0].mxu0
        %v1290 = vpop.f32.mrb[0].mxu0
        %v1291 = vpop.f32.mrb[0].mxu0
        %1292 = vdwg.mxu0
        %v1293 = vpack.c.bf16 %v1288, %v1288
        %v1295 = vunpack.c.l.b16 %v1293
        %v1296 = vpack.c.b16 %v1295, %v1295
        %1297 = vrot.lane.b32.xlu0 %v1296, 8
        %v1298 = vpop.permute.xlu0 %1297
        %vm1300 = vcmask 126016
        %1301 = vst.msk [vmem:[#allocation4] sm:$0xf] %vm1300, %v1298
        %v1302 = vld [vmem:[#allocation2] sm:$0xf]
        %v1303 = vld [vmem:[#allocation3] sm:$0xf]
        %1304 = vrot.lane.b32.xlu0 %v1062, 112
        %v1305 = vpop.permute.xlu0 %1304
        %v1307 = vunpack.c.l.b16 %v1302
        %v1308 = vpack.c.b16 %v1307, %v1307
        %1309 = vrot.lane.b32.xlu0 %v1308, 112
        %v1310 = vpop.permute.xlu0 %1309
        %v1312 = vsel %vm1065, %v1305, 0
        %v1315 = vsel %vm1065, %v1310, 0
        %1317 = vmatprep.subr.bf16.mxu0 0
        %1318 = vmatpush1.bf16.xpose.msra.mxu0 %v1315
        %1319 = vmatprep.subr.bf16.mxu0 0
        %1320 = vmatpush1.bf16.xpose.msra.mxu0 0
        %1321 = vmatprep.subr.bf16.mxu0 0
        %1322 = vmatpush1.bf16.xpose.msra.mxu0 0
        %1323 = vmatprep.subr.bf16.mxu0 0
        %1324 = vmatpush1.bf16.xpose.msra.mxu0 0
        %1325 = vmatprep.subr.bf16.mxu0 0
        %1326 = vmatpush1.bf16.xpose.msra.mxu0 0
        %1327 = vmatprep.subr.bf16.mxu0 0
        %1328 = vmatpush1.bf16.xpose.msra.mxu0 0
        %1329 = vmatprep.subr.bf16.mxu0 0
        %1330 = vmatpush1.bf16.xpose.msra.mxu0 0
        %1331 = vmatprep.subr.bf16.mxu0 0
        %1332 = vmatpush1.bf16.xpose.msra.mxu0 0
        %1333 = vmatprep.subr.bf16.mxu0 0
        %1334 = vmatpush1.bf16.xpose.msra.mxu0 0
        %1335 = vmatprep.subr.bf16.mxu0 0
        %1336 = vmatpush1.bf16.xpose.msra.mxu0 0
        %1337 = vmatprep.subr.bf16.mxu0 0
        %1338 = vmatpush1.bf16.xpose.msra.mxu0 0
        %1339 = vmatprep.subr.bf16.mxu0 0
        %1340 = vmatpush1.bf16.xpose.msra.mxu0 0
        %1341 = vmatprep.subr.bf16.mxu0 0
        %1342 = vmatpush1.bf16.xpose.msra.mxu0 0
        %1343 = vmatprep.subr.bf16.mxu0 0
        %1344 = vmatpush1.bf16.xpose.msra.mxu0 0
        %1345 = vmatprep.subr.bf16.mxu0 0
        %1346 = vmatpush1.bf16.xpose.msra.mxu0 0
        %1347 = vmatprep.subr.bf16.mxu0 0
        %1348 = vmatpush1.bf16.xpose.msra.mxu0 0
        %1349 = vmatprep.mubr.bf16.mxu0 0
        %1350 = vmatmul.mubr.bf16.gmra.mrb[0].mxu0 %v1312
        %v1351 = vpop.f32.mrb[0].mxu0
        %v1352 = vadd.f32 %v999, %v1351
        %v1353 = vpop.f32.mrb[0].mxu0
        %v1354 = vpop.f32.mrb[0].mxu0
        %v1355 = vpop.f32.mrb[0].mxu0
        %1356 = vdwg.mxu0
        %v1357 = vsel %vm1065, %v1352, -inf
        %1358 = vmax.xlane.f32.xlu0 %v1357
        %v1359 = vpop.xlane.xlu0 %1358
        %v1360 = vsub.f32 %v1352, %v1359
        %v1361 = vmul.f32 %v1360, 1.442695
        %v1362 = vpow.pop %v1361
        %v1363 = vsel %vm1065, %v1362, 0.0
        %1364 = vadd.xlane.f32.xlu0 %v1363
        %v1365 = vpop.xlane.xlu0 %1364
        %v1366 = vrcp.pop %v1365
        %v1367 = vmul.f32 %v1362, %v1366
        %v1368 = vpack.c.bf16 %v1367, %v1367
        %v1370 = vunpack.c.l.b16 %v1303
        %v1371 = vpack.c.b16 %v1370, %v1370
        %1372 = vrot.lane.b32.xlu0 %v1371, 112
        %v1373 = vpop.permute.xlu0 %1372
        %v1375 = vsel %vm1065, %v1368, 0
        %v1378 = vsel %vm1127, %v1373, 0
        %1380 = vmatprep.subr.bf16.mxu0 0
        %1381 = vmatpush1.bf16.msra.mxu0 %v1378
        %1382 = vmatprep.subr.bf16.mxu0 0
        %1383 = vmatpush1.bf16.msra.mxu0 0
        %1384 = vmatprep.subr.bf16.mxu0 0
        %1385 = vmatpush1.bf16.msra.mxu0 0
        %1386 = vmatprep.subr.bf16.mxu0 0
        %1387 = vmatpush1.bf16.msra.mxu0 0
        %1388 = vmatprep.subr.bf16.mxu0 0
        %1389 = vmatpush1.bf16.msra.mxu0 0
        %1390 = vmatprep.subr.bf16.mxu0 0
        %1391 = vmatpush1.bf16.msra.mxu0 0
        %1392 = vmatprep.subr.bf16.mxu0 0
        %1393 = vmatpush1.bf16.msra.mxu0 0
        %1394 = vmatprep.subr.bf16.mxu0 0
        %1395 = vmatpush1.bf16.msra.mxu0 0
        %1396 = vmatprep.subr.bf16.mxu0 0
        %1397 = vmatpush1.bf16.msra.mxu0 0
        %1398 = vmatprep.subr.bf16.mxu0 0
        %1399 = vmatpush1.bf16.msra.mxu0 0
        %1400 = vmatprep.subr.bf16.mxu0 0
        %1401 = vmatpush1.bf16.msra.mxu0 0
        %1402 = vmatprep.subr.bf16.mxu0 0
        %1403 = vmatpush1.bf16.msra.mxu0 0
        %1404 = vmatprep.subr.bf16.mxu0 0
        %1405 = vmatpush1.bf16.msra.mxu0 0
        %1406 = vmatprep.subr.bf16.mxu0 0
        %1407 = vmatpush1.bf16.msra.mxu0 0
        %1408 = vmatprep.subr.bf16.mxu0 0
        %1409 = vmatpush1.bf16.msra.mxu0 0
        %1410 = vmatprep.subr.bf16.mxu0 0
        %1411 = vmatpush1.bf16.msra.mxu0 0
        %1412 = vmatprep.mubr.bf16.mxu0 0
        %1413 = vmatmul.mubr.bf16.gmra.mrb[0].mxu0 %v1375
        %v1414 = vpop.f32.mrb[0].mxu0
        %v1415 = vadd.f32 0.0, %v1414
        %v1416 = vpop.f32.mrb[0].mxu0
        %v1417 = vpop.f32.mrb[0].mxu0
        %v1418 = vpop.f32.mrb[0].mxu0
        %1419 = vdwg.mxu0
        %v1420 = vpack.c.bf16 %v1415, %v1415
        %v1422 = vunpack.c.l.b16 %v1420
        %v1423 = vpack.c.b16 %v1422, %v1422
        %1424 = vrot.lane.b32.xlu0 %v1423, 16
        %v1425 = vpop.permute.xlu0 %1424
        %vm1427 = vcmask 191616
        %1428 = vst.msk [vmem:[#allocation4] sm:$0xf] %vm1427, %v1425
        %v1429 = vld [vmem:[#allocation2] sm:$0xf]
        %v1430 = vld [vmem:[#allocation3] sm:$0xf]
        %1431 = vrot.lane.b32.xlu0 %v1062, 104
        %v1432 = vpop.permute.xlu0 %1431
        %v1434 = vunpack.c.l.b16 %v1429
        %v1435 = vpack.c.b16 %v1434, %v1434
        %1436 = vrot.lane.b32.xlu0 %v1435, 104
        %v1437 = vpop.permute.xlu0 %1436
        %v1439 = vsel %vm1065, %v1432, 0
        %v1442 = vsel %vm1065, %v1437, 0
        %1444 = vmatprep.subr.bf16.mxu0 0
        %1445 = vmatpush1.bf16.xpose.msra.mxu0 %v1442
        %1446 = vmatprep.subr.bf16.mxu0 0
        %1447 = vmatpush1.bf16.xpose.msra.mxu0 0
        %1448 = vmatprep.subr.bf16.mxu0 0
        %1449 = vmatpush1.bf16.xpose.msra.mxu0 0
        %1450 = vmatprep.subr.bf16.mxu0 0
        %1451 = vmatpush1.bf16.xpose.msra.mxu0 0
        %1452 = vmatprep.subr.bf16.mxu0 0
        %1453 = vmatpush1.bf16.xpose.msra.mxu0 0
        %1454 = vmatprep.subr.bf16.mxu0 0
        %1455 = vmatpush1.bf16.xpose.msra.mxu0 0
        %1456 = vmatprep.subr.bf16.mxu0 0
        %1457 = vmatpush1.bf16.xpose.msra.mxu0 0
        %1458 = vmatprep.subr.bf16.mxu0 0
        %1459 = vmatpush1.bf16.xpose.msra.mxu0 0
        %1460 = vmatprep.subr.bf16.mxu0 0
        %1461 = vmatpush1.bf16.xpose.msra.mxu0 0
        %1462 = vmatprep.subr.bf16.mxu0 0
        %1463 = vmatpush1.bf16.xpose.msra.mxu0 0
        %1464 = vmatprep.subr.bf16.mxu0 0
        %1465 = vmatpush1.bf16.xpose.msra.mxu0 0
        %1466 = vmatprep.subr.bf16.mxu0 0
        %1467 = vmatpush1.bf16.xpose.msra.mxu0 0
        %1468 = vmatprep.subr.bf16.mxu0 0
        %1469 = vmatpush1.bf16.xpose.msra.mxu0 0
        %1470 = vmatprep.subr.bf16.mxu0 0
        %1471 = vmatpush1.bf16.xpose.msra.mxu0 0
        %1472 = vmatprep.subr.bf16.mxu0 0
        %1473 = vmatpush1.bf16.xpose.msra.mxu0 0
        %1474 = vmatprep.subr.bf16.mxu0 0
        %1475 = vmatpush1.bf16.xpose.msra.mxu0 0
        %1476 = vmatprep.mubr.bf16.mxu0 0
        %1477 = vmatmul.mubr.bf16.gmra.mrb[0].mxu0 %v1439
        %v1478 = vpop.f32.mrb[0].mxu0
        %v1479 = vadd.f32 %v999, %v1478
        %v1480 = vpop.f32.mrb[0].mxu0
        %v1481 = vpop.f32.mrb[0].mxu0
        %v1482 = vpop.f32.mrb[0].mxu0
        %1483 = vdwg.mxu0
        %v1484 = vsel %vm1065, %v1479, -inf
        %1485 = vmax.xlane.f32.xlu0 %v1484
        %v1486 = vpop.xlane.xlu0 %1485
        %v1487 = vsub.f32 %v1479, %v1486
        %v1488 = vmul.f32 %v1487, 1.442695
        %v1489 = vpow.pop %v1488
        %v1490 = vsel %vm1065, %v1489, 0.0
        %1491 = vadd.xlane.f32.xlu0 %v1490
        %v1492 = vpop.xlane.xlu0 %1491
        %v1493 = vrcp.pop %v1492
        %v1494 = vmul.f32 %v1489, %v1493
        %v1495 = vpack.c.bf16 %v1494, %v1494
        %v1497 = vunpack.c.l.b16 %v1430
        %v1498 = vpack.c.b16 %v1497, %v1497
        %1499 = vrot.lane.b32.xlu0 %v1498, 104
        %v1500 = vpop.permute.xlu0 %1499
        %v1502 = vsel %vm1065, %v1495, 0
        %v1505 = vsel %vm1127, %v1500, 0
        %1507 = vmatprep.subr.bf16.mxu0 0
        %1508 = vmatpush1.bf16.msra.mxu0 %v1505
        %1509 = vmatprep.subr.bf16.mxu0 0
        %1510 = vmatpush1.bf16.msra.mxu0 0
        %1511 = vmatprep.subr.bf16.mxu0 0
        %1512 = vmatpush1.bf16.msra.mxu0 0
        %1513 = vmatprep.subr.bf16.mxu0 0
        %1514 = vmatpush1.bf16.msra.mxu0 0
        %1515 = vmatprep.subr.bf16.mxu0 0
        %1516 = vmatpush1.bf16.msra.mxu0 0
        %1517 = vmatprep.subr.bf16.mxu0 0
        %1518 = vmatpush1.bf16.msra.mxu0 0
        %1519 = vmatprep.subr.bf16.mxu0 0
        %1520 = vmatpush1.bf16.msra.mxu0 0
        %1521 = vmatprep.subr.bf16.mxu0 0
        %1522 = vmatpush1.bf16.msra.mxu0 0
        %1523 = vmatprep.subr.bf16.mxu0 0
        %1524 = vmatpush1.bf16.msra.mxu0 0
        %1525 = vmatprep.subr.bf16.mxu0 0
        %1526 = vmatpush1.bf16.msra.mxu0 0
        %1527 = vmatprep.subr.bf16.mxu0 0
        %1528 = vmatpush1.bf16.msra.mxu0 0
        %1529 = vmatprep.subr.bf16.mxu0 0
        %1530 = vmatpush1.bf16.msra.mxu0 0
        %1531 = vmatprep.subr.bf16.mxu0 0
        %1532 = vmatpush1.bf16.msra.mxu0 0
        %1533 = vmatprep.subr.bf16.mxu0 0
        %1534 = vmatpush1.bf16.msra.mxu0 0
        %1535 = vmatprep.subr.bf16.mxu0 0
        %1536 = vmatpush1.bf16.msra.mxu0 0
        %1537 = vmatprep.subr.bf16.mxu0 0
        %1538 = vmatpush1.bf16.msra.mxu0 0
        %1539 = vmatprep.mubr.bf16.mxu0 0
        %1540 = vmatmul.mubr.bf16.gmra.mrb[0].mxu0 %v1502
        %v1541 = vpop.f32.mrb[0].mxu0
        %v1542 = vadd.f32 0.0, %v1541
        %v1543 = vpop.f32.mrb[0].mxu0
        %v1544 = vpop.f32.mrb[0].mxu0
        %v1545 = vpop.f32.mrb[0].mxu0
        %1546 = vdwg.mxu0
        %v1547 = vpack.c.bf16 %v1542, %v1542
        %v1549 = vunpack.c.l.b16 %v1547
        %v1550 = vpack.c.b16 %v1549, %v1549
        %1551 = vrot.lane.b32.xlu0 %v1550, 24
        %v1552 = vpop.permute.xlu0 %1551
        %vm1554 = vcmask 257216
        %1555 = vst.msk [vmem:[#allocation4] sm:$0xf] %vm1554, %v1552
        %v1556 = vld [vmem:[#allocation4] sm:$0xf]
        %v1557 = vld [vmem:[#allocation17] sm:$0xf]
        %v1558 = vld [vmem:[#allocation17 + $0x4] sm:$0xf]
        %v1559 = vld [vmem:[#allocation17 + $0x8] sm:$0xf]
        %v1560 = vld [vmem:[#allocation17 + $0xc] sm:$0xf]
        %v1561 = vld [vmem:[#allocation19] sm:$0x1]
        %v1563 = vlaneseq
        %v1564 = vshrl.u32 %v1563, 7
        %v1565 = vsub.s32 0, %v1564
        %v1566 = vrot.slane %v1561, %v1565
        %v1572 = vunpack.c.l.b16 %v1557
        %v1573 = vunpack.c.l.b16 %v1558
        %v1574 = vunpack.c.l.b16 %v1559
        %v1575 = vunpack.c.l.b16 %v1560
        %v1576 = vpack.c.b16 %v1573, %v1572
        %v1577 = vpack.c.b16 %v1575, %v1574
        %v1581 = vsel %vm1017, %v1556, 0
        %1583 = vmatprep.subr.bf16.mxu0 0
        %1584 = vmatpush1.bf16.msra.mxu0 %v1576
        %1585 = vmatprep.subr.bf16.mxu0 0
        %1586 = vmatpush1.bf16.msra.mxu0 %v1577
        %1587 = vmatprep.subr.bf16.mxu0 0
        %1588 = vmatpush1.bf16.msra.mxu0 0
        %1589 = vmatprep.subr.bf16.mxu0 0
        %1590 = vmatpush1.bf16.msra.mxu0 0
        %1591 = vmatprep.subr.bf16.mxu0 0
        %1592 = vmatpush1.bf16.msra.mxu0 0
        %1593 = vmatprep.subr.bf16.mxu0 0
        %1594 = vmatpush1.bf16.msra.mxu0 0
        %1595 = vmatprep.subr.bf16.mxu0 0
        %1596 = vmatpush1.bf16.msra.mxu0 0
        %1597 = vmatprep.subr.bf16.mxu0 0
        %1598 = vmatpush1.bf16.msra.mxu0 0
        %1599 = vmatprep.subr.bf16.mxu0 0
        %1600 = vmatpush1.bf16.msra.mxu0 0
        %1601 = vmatprep.subr.bf16.mxu0 0
        %1602 = vmatpush1.bf16.msra.mxu0 0
        %1603 = vmatprep.subr.bf16.mxu0 0
        %1604 = vmatpush1.bf16.msra.mxu0 0
        %1605 = vmatprep.subr.bf16.mxu0 0
        %1606 = vmatpush1.bf16.msra.mxu0 0
        %1607 = vmatprep.subr.bf16.mxu0 0
        %1608 = vmatpush1.bf16.msra.mxu0 0
        %1609 = vmatprep.subr.bf16.mxu0 0
        %1610 = vmatpush1.bf16.msra.mxu0 0
        %1611 = vmatprep.subr.bf16.mxu0 0
        %1612 = vmatpush1.bf16.msra.mxu0 0
        %1613 = vmatprep.subr.bf16.mxu0 0
        %1614 = vmatpush1.bf16.msra.mxu0 0
        %1615 = vmatprep.mubr.bf16.mxu0 0
        %1616 = vmatmul.mubr.bf16.gmra.mrb[0].mxu0 %v1581
        %v1617 = vpop.f32.mrb[0].mxu0
        %v1618 = vadd.f32 %v1566, %v1617
        %v1619 = vpop.f32.mrb[0].mxu0
        %v1620 = vpop.f32.mrb[0].mxu0
        %v1621 = vpop.f32.mrb[0].mxu0
        %1622 = vdwg.mxu0
        %v1623 = vadd.f32 %v1618, %v997
        %v1624 = vld [vmem:[#allocation20] sm:$0x1]
        %v1625 = vld [vmem:[#allocation22] sm:$0x1]
        %v1626 = vsel %vm1017, %v1623, 0.0
        %1627 = vadd.xlane.f32.xlu0 %v1626
        %v1628 = vpop.xlane.xlu0 %1627
        %v1629 = vrcp.pop 32.0
        %v1630 = vmul.f32 %v1628, %v1629
        %v1631 = vsub.f32 %v1623, %v1630
        %v1632 = vmul.f32 %v1631, %v1631
        %v1633 = vsel %vm1017, %v1632, 0.0
        %1634 = vadd.xlane.f32.xlu0 %v1633
        %v1635 = vpop.xlane.xlu0 %1634
        %v1636 = vmul.f32 %v1635, %v1629
        %v1637 = vadd.f32 %v1636, 1e-05
        %v1638 = vrsqrt.pop %v1637
        %v1639 = vmul.f32 %v1631, %v1638
        %v1641 = vlaneseq
        %v1642 = vshrl.u32 %v1641, 7
        %v1643 = vsub.s32 0, %v1642
        %v1644 = vrot.slane %v1624, %v1643
        %v1646 = vmul.f32 %v1639, %v1644
        %v1648 = vlaneseq
        %v1649 = vshrl.u32 %v1648, 7
        %v1650 = vsub.s32 0, %v1649
        %v1651 = vrot.slane %v1625, %v1650
        %v1653 = vadd.f32 %v1646, %v1651
        %v1654 = vpack.c.bf16 %v1653, %v1653
        %v1655 = vld [vmem:[#allocation23] sm:$0xf]
        %v1656 = vld [vmem:[#allocation23 + $0x4] sm:$0xf]
        %v1657 = vld [vmem:[#allocation23 + $0x8] sm:$0xf]
        %v1658 = vld [vmem:[#allocation23 + $0xc] sm:$0xf]
        %v1659 = vld [vmem:[#allocation25] sm:$0x1]
        %v1661 = vlaneseq
        %v1662 = vshrl.u32 %v1661, 7
        %v1663 = vsub.s32 0, %v1662
        %v1664 = vrot.slane %v1659, %v1663
        %v1670 = vunpack.c.l.b16 %v1655
        %v1671 = vunpack.c.l.b16 %v1656
        %v1672 = vunpack.c.l.b16 %v1657
        %v1673 = vunpack.c.l.b16 %v1658
        %v1674 = vpack.c.b16 %v1671, %v1670
        %v1675 = vpack.c.b16 %v1673, %v1672
        %v1679 = vsel %vm1017, %v1654, 0
        %1681 = vmatprep.subr.bf16.mxu0 0
        %1682 = vmatpush1.bf16.msra.mxu0 %v1674
        %1683 = vmatprep.subr.bf16.mxu0 0
        %1684 = vmatpush1.bf16.msra.mxu0 %v1675
        %1685 = vmatprep.subr.bf16.mxu0 0
        %1686 = vmatpush1.bf16.msra.mxu0 0
        %1687 = vmatprep.subr.bf16.mxu0 0
        %1688 = vmatpush1.bf16.msra.mxu0 0
        %1689 = vmatprep.subr.bf16.mxu0 0
        %1690 = vmatpush1.bf16.msra.mxu0 0
        %1691 = vmatprep.subr.bf16.mxu0 0
        %1692 = vmatpush1.bf16.msra.mxu0 0
        %1693 = vmatprep.subr.bf16.mxu0 0
        %1694 = vmatpush1.bf16.msra.mxu0 0
        %1695 = vmatprep.subr.bf16.mxu0 0
        %1696 = vmatpush1.bf16.msra.mxu0 0
        %1697 = vmatprep.subr.bf16.mxu0 0
        %1698 = vmatpush1.bf16.msra.mxu0 0
        %1699 = vmatprep.subr.bf16.mxu0 0
        %1700 = vmatpush1.bf16.msra.mxu0 0
        %1701 = vmatprep.subr.bf16.mxu0 0
        %1702 = vmatpush1.bf16.msra.mxu0 0
        %1703 = vmatprep.subr.bf16.mxu0 0
        %1704 = vmatpush1.bf16.msra.mxu0 0
        %1705 = vmatprep.subr.bf16.mxu0 0
        %1706 = vmatpush1.bf16.msra.mxu0 0
        %1707 = vmatprep.subr.bf16.mxu0 0
        %1708 = vmatpush1.bf16.msra.mxu0 0
        %1709 = vmatprep.subr.bf16.mxu0 0
        %1710 = vmatpush1.bf16.msra.mxu0 0
        %1711 = vmatprep.subr.bf16.mxu0 0
        %1712 = vmatpush1.bf16.msra.mxu0 0
        %1713 = vmatprep.mubr.bf16.mxu0 0
        %1714 = vmatmul.mubr.bf16.gmra.mrb[0].mxu0 %v1679
        %v1715 = vpop.f32.mrb[0].mxu0
        %v1716 = vadd.f32 %v1664, %v1715
        %v1717 = vpop.f32.mrb[0].mxu0
        %v1718 = vpop.f32.mrb[0].mxu0
        %v1719 = vpop.f32.mrb[0].mxu0
        %1720 = vdwg.mxu0
        %v1721 = vmax.f32 %v1716, 0.0
        %v1722 = vpack.c.bf16 %v1721, %v1721
        %v1723 = vld [vmem:[#allocation26] sm:$0xf]
        %v1724 = vld [vmem:[#allocation26 + $0x4] sm:$0xf]
        %v1725 = vld [vmem:[#allocation26 + $0x8] sm:$0xf]
        %v1726 = vld [vmem:[#allocation26 + $0xc] sm:$0xf]
        %v1727 = vld [vmem:[#allocation26 + $0x10] sm:$0xf]
        %v1728 = vld [vmem:[#allocation26 + $0x14] sm:$0xf]
        %v1729 = vld [vmem:[#allocation26 + $0x18] sm:$0xf]
        %v1730 = vld [vmem:[#allocation26 + $0x1c] sm:$0xf]
        %v1731 = vld [vmem:[#allocation26 + $0x20] sm:$0xf]
        %v1732 = vld [vmem:[#allocation26 + $0x24] sm:$0xf]
        %v1733 = vld [vmem:[#allocation26 + $0x28] sm:$0xf]
        %v1734 = vld [vmem:[#allocation26 + $0x2c] sm:$0xf]
        %v1735 = vld [vmem:[#allocation26 + $0x30] sm:$0xf]
        %v1736 = vld [vmem:[#allocation26 + $0x34] sm:$0xf]
        %v1737 = vld [vmem:[#allocation26 + $0x38] sm:$0xf]
        %v1738 = vld [vmem:[#allocation26 + $0x3c] sm:$0xf]
        %v1739 = vld [vmem:[#allocation28] sm:$0x1]
        %v1741 = vlaneseq
        %v1742 = vshrl.u32 %v1741, 7
        %v1743 = vsub.s32 0, %v1742
        %v1744 = vrot.slane %v1739, %v1743
        %v1762 = vunpack.c.l.b16 %v1723
        %v1763 = vunpack.c.l.b16 %v1724
        %v1764 = vunpack.c.l.b16 %v1725
        %v1765 = vunpack.c.l.b16 %v1726
        %v1766 = vunpack.c.l.b16 %v1727
        %v1767 = vunpack.c.l.b16 %v1728
        %v1768 = vunpack.c.l.b16 %v1729
        %v1769 = vunpack.c.l.b16 %v1730
        %v1770 = vunpack.c.l.b16 %v1731
        %v1771 = vunpack.c.l.b16 %v1732
        %v1772 = vunpack.c.l.b16 %v1733
        %v1773 = vunpack.c.l.b16 %v1734
        %v1774 = vunpack.c.l.b16 %v1735
        %v1775 = vunpack.c.l.b16 %v1736
        %v1776 = vunpack.c.l.b16 %v1737
        %v1777 = vunpack.c.l.b16 %v1738
        %v1778 = vpack.c.b16 %v1763, %v1762
        %v1779 = vpack.c.b16 %v1765, %v1764
        %v1780 = vpack.c.b16 %v1767, %v1766
        %v1781 = vpack.c.b16 %v1769, %v1768
        %v1782 = vpack.c.b16 %v1771, %v1770
        %v1783 = vpack.c.b16 %v1773, %v1772
        %v1784 = vpack.c.b16 %v1775, %v1774
        %v1785 = vpack.c.b16 %v1777, %v1776
        %1794 = vmatprep.subr.bf16.mxu0 0
        %1795 = vmatpush1.bf16.msra.mxu0 %v1778
        %1796 = vmatprep.subr.bf16.mxu0 0
        %1797 = vmatpush1.bf16.msra.mxu0 %v1779
        %1798 = vmatprep.subr.bf16.mxu0 0
        %1799 = vmatpush1.bf16.msra.mxu0 %v1780
        %1800 = vmatprep.subr.bf16.mxu0 0
        %1801 = vmatpush1.bf16.msra.mxu0 %v1781
        %1802 = vmatprep.subr.bf16.mxu0 0
        %1803 = vmatpush1.bf16.msra.mxu0 %v1782
        %1804 = vmatprep.subr.bf16.mxu0 0
        %1805 = vmatpush1.bf16.msra.mxu0 %v1783
        %1806 = vmatprep.subr.bf16.mxu0 0
        %1807 = vmatpush1.bf16.msra.mxu0 %v1784
        %1808 = vmatprep.subr.bf16.mxu0 0
        %1809 = vmatpush1.bf16.msra.mxu0 %v1785
        %1810 = vmatprep.subr.bf16.mxu0 0
        %1811 = vmatpush1.bf16.msra.mxu0 0
        %1812 = vmatprep.subr.bf16.mxu0 0
        %1813 = vmatpush1.bf16.msra.mxu0 0
        %1814 = vmatprep.subr.bf16.mxu0 0
        %1815 = vmatpush1.bf16.msra.mxu0 0
        %1816 = vmatprep.subr.bf16.mxu0 0
        %1817 = vmatpush1.bf16.msra.mxu0 0
        %1818 = vmatprep.subr.bf16.mxu0 0
        %1819 = vmatpush1.bf16.msra.mxu0 0
        %1820 = vmatprep.subr.bf16.mxu0 0
        %1821 = vmatpush1.bf16.msra.mxu0 0
        %1822 = vmatprep.subr.bf16.mxu0 0
        %1823 = vmatpush1.bf16.msra.mxu0 0
        %1824 = vmatprep.subr.bf16.mxu0 0
        %1825 = vmatpush1.bf16.msra.mxu0 0
        %1826 = vmatprep.mubr.bf16.mxu0 0
        %1827 = vmatmul.mubr.bf16.gmra.mrb[0].mxu0 %v1722
        %v1828 = vpop.f32.mrb[0].mxu0
        %v1829 = vadd.f32 %v1744, %v1828
        %v1830 = vpop.f32.mrb[0].mxu0
        %v1831 = vpop.f32.mrb[0].mxu0
        %v1832 = vpop.f32.mrb[0].mxu0
        %1833 = vdwg.mxu0
        %v1834 = vadd.f32 %v1829, %v1653
        %v1835 = vld [vmem:[#allocation29] sm:$0x1]
        %v1836 = vld [vmem:[#allocation31] sm:$0x1]
        %v1837 = vsel %vm1017, %v1834, 0.0
        %1838 = vadd.xlane.f32.xlu0 %v1837
        %v1839 = vpop.xlane.xlu0 %1838
        %v1840 = vmul.f32 %v1839, %v1629
        %v1841 = vsub.f32 %v1834, %v1840
        %v1842 = vmul.f32 %v1841, %v1841
        %v1843 = vsel %vm1017, %v1842, 0.0
        %1844 = vadd.xlane.f32.xlu0 %v1843
        %v1845 = vpop.xlane.xlu0 %1844
        %v1846 = vmul.f32 %v1845, %v1629
        %v1847 = vadd.f32 %v1846, 1e-05
        %v1848 = vrsqrt.pop %v1847
        %v1849 = vmul.f32 %v1841, %v1848
        %v1851 = vlaneseq
        %v1852 = vshrl.u32 %v1851, 7
        %v1853 = vsub.s32 0, %v1852
        %v1854 = vrot.slane %v1835, %v1853
        %v1856 = vmul.f32 %v1849, %v1854
        %v1858 = vlaneseq
        %v1859 = vshrl.u32 %v1858, 7
        %v1860 = vsub.s32 0, %v1859
        %v1861 = vrot.slane %v1836, %v1860
        %v1863 = vadd.f32 %v1856, %v1861
        %1864 = vst.msk [vmem:[%s865] sm:$0xff] %vm1017, %v1863
        %s1865 = sand.u32 %s449, 1
        %s1866 = scalar_lea.sflag [#allocation7], %s1865
        %s1867 = sand.u32 %s449, 1
        %s1868 = smul.addr %s1867, 8
        %s1869 = scalar_lea.vmem [#allocation32], %s1868
        // Predicated region
        $region161: #{tpu_custom_call.1} parent=87 // pred_check
          %p1870 = pneg %p459
        $region162: #{tpu_custom_call.1} parent=87 // pred_check_branch
          %1872 = sbr.rel (%p1870) target = $region164
        $region163: #{tpu_custom_call.1} parent=87 // pred_region
          %s1874 = ssub.s32 128, 128
          %1875 = vsyncadd %s1866, %s1874
          %s1876 = sadd.s32 %s51, %s50
          %s1877 = smul.addr %s1876, 128
          %s1878 = scalar_lea.hbm %s17, %s1877
          %s1880 = sshll.u32 %s1869, 4
          %s1881 = int_to_ptr.vmem [resolvable:$true] %s1880
          %1883 = dma.vmem_to_hbm [thread:$0]  %s1881, 128, %s1878, %s1866
        $region164: #{tpu_custom_call.1} parent=87 // pred_fallthru
          _
      $region88: #{tpu_custom_call.1} parent=5 // pred_fallthru
        _
      %p1884 = scmp.le.s32.totalorder 2, %s41
      // Predicated region
      $region165: #{tpu_custom_call.1} parent=5 // pred_check
        %p1885 = pneg %p1884
      $region166: #{tpu_custom_call.1} parent=5 // pred_check_branch
        %1887 = sbr.rel (%p1885) target = $region168
      $region167: #{tpu_custom_call.1} parent=5 // pred_region
        %s1888 = ssub.s32 %s41, 2
        // Predicated region
        $region169: #{tpu_custom_call.1} parent=167 // pred_check
          %p1889 = pneg %p465
        $region170: #{tpu_custom_call.1} parent=167 // pred_check_branch
          %1891 = sbr.rel (%p1889) target = $region172
        $region171: #{tpu_custom_call.1} parent=167 // pred_region
          %s1892 = sand.u32 %s450, 1
          %s1893 = scalar_lea.sflag [#allocation7], %s1892
          %s1894 = sand.u32 %s450, 1
          %s1895 = smul.addr %s1894, 8
          %s1896 = scalar_lea.vmem [#allocation32], %s1895
          %1897 = dma.done %s1893, 128
        $region172: #{tpu_custom_call.1} parent=167 // pred_fallthru
          _
      $region168: #{tpu_custom_call.1} parent=5 // pred_fallthru
        _
    $region6: #{tpu_custom_call.1} parent=1 // loop_footer
      %s45 = sadd.s32 1, %s41
    $region7: #{tpu_custom_call.1} parent=1 // loop_footer_branch
      %40 = sbr.rel target = $region3
    $region8: #{tpu_custom_call.1} parent=1 // loop_exit
      _
    %1898 = vsyncpa [#allocation6], 1
    %s1899 = scalar_lea.sflag [#allocation6], 1
    %1900 = vsyncpa %s1899, 1
    %1901 = vsyncpa [#allocation9], 1
    %s1902 = scalar_lea.sflag [#allocation9], 1
    %1903 = vsyncpa %s1902, 1
    %1904 = vsyncpa [#allocation12], 1
    %s1905 = scalar_lea.sflag [#allocation12], 1
    %1906 = vsyncpa %s1905, 1
    %1907 = vsyncpa [#allocation15], 1
    %1908 = vsyncpa [#allocation18], 1
    %1909 = vsyncpa [#allocation21], 1
    %1910 = vsyncpa [#allocation24], 1
    %1911 = vsyncpa [#allocation27], 1
    %1912 = vsyncpa [#allocation30], 1
    %1913 = vsyncpa [#allocation7], 1
    %s1914 = scalar_lea.sflag [#allocation7], 1
    %1915 = vsyncpa %s1914, 1

</llo_original>
